<compile_context>
chip_gen: v7x
topology: tpu7x:2x2x1
jax: 0.10.0
libtpu: 0.0.40
codegen_flags: <defaults>
</compile_context>

<pallas_src>
import math

import numpy as np
import jax
import jax.numpy as jnp
from jax.experimental import pallas as pl
from jax.experimental.pallas import tpu as pltpu

KSIZE = 5
EPS = 1e-5
PHASES = 16      # total down/up factor of the network (2**4 pools / upsamples)
PADR = 8         # scratch pad rows above / below the live rows

EN_IN = (1, 2, 8, 32)
EN_OUT = (2, 8, 32, 128)
DE_IN = (128, 32, 8, 2)
DE_OUT = (32, 8, 2, 1)


# --------------------------- host-side weight folding -----------------------

def _build_tables(enc_params, dec_params):
    """Fold the whole network into one weight table + one scale/shift table.

    Layer l becomes  out_row[m] = concat_d(in_row[m+d]) @ W_l  (d = -1..1, or
    -2..2 for the bottleneck conv) in a fixed row space of N = ndelay//16 rows
    per signal, lane = phase*C + channel.  Encoder weight columns are ordered
    [even conv phases | odd conv phases] so MaxPool1d(2,2) is a max of the two
    lane halves.  Decoder weights fold the BatchNorm scale and the *previous*
    layer's Upsample(x2) (polyphase); the last layer also folds its own
    upsample by duplicating output columns.
    """
    blocks, specs = [], []
    ptab = np.zeros((16, 128), np.float32)

    # ------------------------------ encoder ---------------------------------
    p_in = PHASES
    for i, (w, b, scale, shift) in enumerate(enc_params):
        w = np.asarray(w, np.float32)
        b = np.asarray(b, np.float32).reshape(-1)
        scale = np.asarray(scale, np.float32).reshape(-1)
        shift = np.asarray(shift, np.float32).reshape(-1)
        _, cin, cout = w.shape
        win, wout = p_in * cin, p_in * cout
        half = (p_in // 2) * cout
        W = np.zeros((3 * win, wout), np.float32)
        for p in range(p_in):
            col0 = (p // 2) * cout + (0 if p % 2 == 0 else half)
            for t in range(KSIZE):
                j = p_in + p + t - 2                  # position in 3-row window
                d, pp = divmod(j, p_in)               # (row shift, phase)
                k0 = d * win + pp * cin
                W[k0:k0 + cin, col0:col0 + cout] += w[t]
        blocks.append(W)
        ptab[i, :half] = np.tile(scale, p_in // 2)                # BN scale
        ptab[4 + i, :half] = np.tile(b * scale + shift, p_in // 2)  # b*s + shift
        specs.append(dict(win=win, wout=wout, shifts=(-1, 0, 1),
                          is_enc=True, prow=i, srow=4 + i))
        p_in //= 2

    # ------------------------------ decoder ---------------------------------
    p_a = 1                                            # phases of dec input
    for j, (w, b, scale, shift) in enumerate(dec_params):
        w = np.asarray(w, np.float32)
        b = np.asarray(b, np.float32).reshape(-1)
        scale = np.asarray(scale, np.float32).reshape(-1)
        shift = np.asarray(shift, np.float32).reshape(-1)
        _, cin, cout = w.shape
        ws = w * scale[None, None, :]                  # fold BN scale (no max)
        sh = b * scale + shift
        if j == 0:
            # Conv acts directly on the 1-phase bottleneck: 5 row shifts.
            win, wout = cin, cout
            W = np.zeros((KSIZE * win, wout), np.float32)
            for t in range(KSIZE):
                W[t * win:(t + 1) * win, :] = ws[t]
            shvec, shifts, p_next = sh, (-2, -1, 0, 1, 2), 1
        else:
            # Conv acts on Upsample(prev): fold the upsample (polyphase).
            win = p_a * cin
            p_u = 2 * p_a
            wout = p_u * cout
            W = np.zeros((3 * win, wout), np.float32)
            for q in range(p_u):
                for t in range(KSIZE):
                    s = p_u + q + t - 2
                    a_idx = s // 2                      # index into prev act
                    d, pp = divmod(a_idx, p_a)
                    k0 = d * win + pp * cin
                    W[k0:k0 + cin, q * cout:(q + 1) * cout] += ws[t]
            shvec, shifts, p_next = np.tile(sh, p_u), (-1, 0, 1), p_u
        if j == 3:
            # Fold the final Upsample(x2) into duplicated output columns.
            assert cout == 1
            W = np.repeat(W, 2, axis=1)
            shvec = np.repeat(shvec, 2)
            wout = 2 * wout
        blocks.append(W)
        ptab[8 + j, :wout] = shvec
        specs.append(dict(win=win, wout=wout, shifts=shifts,
                          is_enc=False, prow=-1, srow=8 + j))
        p_a = p_next

    # Pack all weight blocks into a single (rows, 256) table.
    offs, rows = [], 0
    for Wb in blocks:
        offs.append(rows)
        rows += Wb.shape[0]
    rows_pad = ((rows + 7) // 8) * 8
    wtab = np.zeros((rows_pad, 256), np.float32)
    for off, Wb in zip(offs, blocks):
        wtab[off:off + Wb.shape[0], :Wb.shape[1]] = Wb
    for spec, off in zip(specs, offs):
        spec['off'] = off
    return jnp.asarray(wtab), jnp.asarray(ptab), specs


# ----------------------------- fused Pallas kernel --------------------------

def _make_kernel(tb, nrows, specs, use_bf16):
    """Whole-network kernel for a block of `tb` signals (nrows rows each)."""
    R = tb * nrows
    last = len(specs) - 1

    def kernel(x_ref, wtab_ref, ptab_ref, pos_ref, out_ref, act_ref):
        # Zero the pad-row strips once per grid step (aligned 8-row stores).
        zeros = jnp.zeros((PADR, 128), jnp.float32)
        act_ref[0:PADR, :] = zeros
        act_ref[PADR + R:PADR + R + PADR, :] = zeros

        # Boundary masks (hoisted): True where the shifted row stays inside
        # the same signal; otherwise the tap is the conv's zero padding.
        pos = pos_ref[...]                                    # (R, 1) int32
        valid = {-2: pos >= 2, -1: pos >= 1,
                 1: pos <= nrows - 2, 2: pos <= nrows - 3}

        # Stage the input block: row m of a signal = samples 16m .. 16m+15.
        act_ref[PADR:PADR + R, 0:PHASES] = x_ref[...]

        for li, sp in enumerate(specs):
            win, wout, shifts = sp['win'], sp['wout'], sp['shifts']
            # im2col in VMEM: lane-concat the contiguous row-shifted slabs.
            slabs = []
            for d in shifts:
                s = act_ref[PADR + d:PADR + d + R, 0:win]
                if d != 0:
                    s = jnp.where(valid[d], s, 0.0)
                slabs.append(s)
            xcat = jnp.concatenate(slabs, axis=1)             # (R, K)
            w = wtab_ref[sp['off']:sp['off'] + len(shifts) * win, 0:wout]
            if use_bf16 and len(shifts) * win >= 192:
                y = jnp.dot(xcat.astype(jnp.bfloat16), w.astype(jnp.bfloat16),
                            preferred_element_type=jnp.float32)
            else:
                y = jnp.dot(xcat, w, preferred_element_type=jnp.float32)
            if sp['is_enc']:
                half = wout // 2
                # MaxPool1d(2,2): even conv phases are the first lane half.
                y = jnp.maximum(y[:, :half], y[:, half:])
                sc = ptab_ref[sp['prow']:sp['prow'] + 1, 0:half]
                sh = ptab_ref[sp['srow']:sp['srow'] + 1, 0:half]
                y = jnp.maximum(y * sc + sh, 0.0)             # BN(eval) + ReLU
                outw = half
            else:
                sh = ptab_ref[sp['srow']:sp['srow'] + 1, 0:wout]
                y = jnp.maximum(y + sh, 0.0)                  # BN(eval) + ReLU
                outw = wout
            if li == last:
                out_ref[...] = y                              # (R, 16) slab
            else:
                act_ref[PADR:PADR + R, 0:outw] = y

    return kernel


# ------------------------------- glue / wrappers ----------------------------

def deep_gcc_forward(x, enc_params, dec_params, *, target_rows=512,
                     use_bf16_matmuls=False):
    nb, nf, npair, ndelay = x.shape
    assert ndelay % PHASES == 0 and ndelay >= PHASES, \
        "ndelay must be a multiple of 16"
    nrows = ndelay // PHASES                 # rows per signal in phase layout
    n = nb * nf * npair

    wtab, ptab, specs = _build_tables(enc_params, dec_params)

    # Block size: tb signals per step; R = tb*nrows must be a multiple of 8.
    g = 8 // math.gcd(nrows, 8)
    tb = min(max(target_rows // nrows, 1), n)
    tb = max(g, (tb // g) * g)
    nblk = -(-n // tb)                       # ceil: padded remainder block
    if nblk > 1 and nblk % 2:                # keep both v7x TensorCores busy
        nblk += 1
    n_pad = nblk * tb
    R = tb * nrows

    xin = x.astype(jnp.float32).reshape(n * nrows, PHASES)
    if n_pad > n:
        xin = jnp.concatenate(
            [xin, jnp.zeros(((n_pad - n) * nrows, PHASES), jnp.float32)], axis=0)

    # Row position within each signal (one small input, masks built in-kernel).
    pos = jnp.tile(jnp.arange(nrows, dtype=jnp.int32), tb).reshape(R, 1)

    out = pl.pallas_call(
        _make_kernel(tb, nrows, specs, use_bf16_matmuls),
        out_shape=jax.ShapeDtypeStruct((n_pad * nrows, PHASES), jnp.float32),
        grid=(nblk,),
        in_specs=[
            pl.BlockSpec((R, PHASES), lambda i: (i, 0)),      # input block
            pl.BlockSpec(wtab.shape, lambda i: (0, 0)),       # weight table
            pl.BlockSpec(ptab.shape, lambda i: (0, 0)),       # scale/shift
            pl.BlockSpec((R, 1), lambda i: (0, 0)),           # row positions
        ],
        out_specs=pl.BlockSpec((R, PHASES), lambda i: (i, 0)),
        scratch_shapes=[pltpu.VMEM((R + 2 * PADR, 128), jnp.float32)],
        compiler_params=pltpu.CompilerParams(
            dimension_semantics=("parallel",),
            vmem_limit_bytes=32 * 1024 * 1024),
    )(xin, wtab, ptab, pos)

    # Row-major (n*nrows, 16) is exactly (n, ndelay): the reshape is free.
    return out[:n * nrows].reshape(nb, nf, npair, ndelay)


# ---------------------------- parameter init --------------------------------

def init_params(key):
    enc, dec = [], []
    for idx, (cin, cout) in enumerate(zip(EN_IN + DE_IN, EN_OUT + DE_OUT)):
        key, kw, kb, kg, kbe, km, kv = jax.random.split(key, 7)
        fan_in = cin * KSIZE
        # Conv1d weight: torch layout (Cout, Cin, K); stored as (K, Cin, Cout).
        w = jax.random.normal(kw, (KSIZE, cin, cout), jnp.float32) / jnp.sqrt(fan_in)
        b = 0.05 * jax.random.normal(kb, (cout,), jnp.float32)
        gamma = 1.0 + 0.1 * jax.random.normal(kg, (cout,), jnp.float32)
        beta = 0.05 * jax.random.normal(kbe, (cout,), jnp.float32)
        rmean = 0.05 * jax.random.normal(km, (cout,), jnp.float32)
        rvar = 1.0 + 0.1 * jax.random.uniform(kv, (cout,), jnp.float32)
        scale = gamma / jnp.sqrt(rvar + EPS)
        shift = beta - rmean * scale
        (enc if idx < 4 else dec).append((w, b, scale, shift))
    return enc, dec


# ------------------------- pure-JAX reference (check) -----------------------

def _ref_forward(x, enc_params, dec_params):
    nb, nf, npair, nd = x.shape
    h = x.reshape(-1, 1, nd).astype(jnp.float32)          # NCW, like PyTorch
    dn = ('NCH', 'OIH', 'NCH')

    def conv(h, w):
        wt = jnp.transpose(w, (2, 1, 0))                   # (K,Cin,Cout)->(O,I,K)
        return jax.lax.conv_general_dilated(h, wt, (1,), [(2, 2)],
                                            dimension_numbers=dn)

    for (w, b, scale, shift) in enc_params:
        h = conv(h, w) + b.reshape(1, -1, 1)
        h = jnp.maximum(h[:, :, 0::2], h[:, :, 1::2])      # MaxPool1d(2,2)
        h = jnp.maximum(h * scale.reshape(1, -1, 1) + shift.reshape(1, -1, 1), 0.0)
    for (w, b, scale, shift) in dec_params:
        h = conv(h, w) + b.reshape(1, -1, 1)
        h = jnp.repeat(h, 2, axis=2)                       # Upsample x2 nearest
        h = jnp.maximum(h * scale.reshape(1, -1, 1) + shift.reshape(1, -1, 1), 0.0)
    return h.reshape(nb, nf, npair, nd)


# ----------------------------------- main ------------------------------------

if __name__ == "__main__":
    key = jax.random.PRNGKey(0)
    pkey, xkey = jax.random.split(key)
    enc_params, dec_params = init_params(pkey)

    nb, nf, npair, ndelay = 2, 4, 2, 32   # ndelay must be a multiple of 16
    x = jax.random.normal(xkey, (nb, nf, npair, ndelay), jnp.float32)

    out = deep_gcc_forward(x, enc_params, dec_params)
    out = jax.block_until_ready(out)
    assert out.shape == (nb, nf, npair, ndelay)

    ref = jax.block_until_ready(_ref_forward(x, enc_params, dec_params))
    err = float(jnp.max(jnp.abs(out - ref)))
    tol = 1e-2 * (1.0 + float(jnp.max(jnp.abs(ref))))
    assert err < tol, f"kernel/reference mismatch: max abs err {err} (tol {tol})"

    print("KERNEL_OK")
</pallas_src>

<mosaic_0001>
module attributes {stable_mosaic.version = 11 : i64} {
  func.func @kernel(%arg0: i32, %arg1: memref<32x16xf32, #tpu.memory_space<vmem>>, %arg2: memref<1192x256xf32, #tpu.memory_space<vmem>>, %arg3: memref<16x128xf32, #tpu.memory_space<vmem>>, %arg4: memref<32x1xi32, #tpu.memory_space<vmem>>, %arg5: memref<32x16xf32, #tpu.memory_space<vmem>>, %arg6: memref<48x128xf32, #tpu.memory_space<vmem>>) attributes {dimension_semantics = [#tpu.dimension_semantics<parallel>], iteration_bounds = array<i64: 1>, scalar_prefetch = 0 : i64, scratch_operands = 1 : i64, tpu.core_type = #tpu.core_type<tc>, window_params = [{transform_indices = @transform_0, window_bounds = array<i64: 32, 16>}, {pipeline_mode = #tpu.pipeline_mode<synchronous>, transform_indices = @transform_1, window_bounds = array<i64: 1192, 256>}, {pipeline_mode = #tpu.pipeline_mode<synchronous>, transform_indices = @transform_2, window_bounds = array<i64: 16, 128>}, {pipeline_mode = #tpu.pipeline_mode<synchronous>, transform_indices = @transform_3, window_bounds = array<i64: 32, 1>}, {transform_indices = @transform_4, window_bounds = array<i64: 32, 16>}]} {
    %cst = arith.constant 0.000000e+00 : f32
    %0 = vector.broadcast %cst : f32 to vector<8x128xf32>
    %c0 = arith.constant 0 : index
    %c0_0 = arith.constant 0 : index
    %1 = vector.load %arg6[%c0, %c0_0] : memref<48x128xf32, #tpu.memory_space<vmem>>, vector<8x128xf32>
    tpu.vector_store %arg6[%c0, %c0_0], %0 {strides = array<i32>} : memref<48x128xf32, #tpu.memory_space<vmem>>, vector<8x128xf32>,
    %c40 = arith.constant 40 : index
    %c0_1 = arith.constant 0 : index
    %2 = vector.load %arg6[%c40, %c0_1] : memref<48x128xf32, #tpu.memory_space<vmem>>, vector<8x128xf32>
    tpu.vector_store %arg6[%c40, %c0_1], %0 {strides = array<i32>} : memref<48x128xf32, #tpu.memory_space<vmem>>, vector<8x128xf32>,
    %c0_2 = arith.constant 0 : index
    %c0_3 = arith.constant 0 : index
    %3 = vector.load %arg4[%c0_2, %c0_3] : memref<32x1xi32, #tpu.memory_space<vmem>>, vector<32x1xi32>
    %c2_i32 = arith.constant 2 : i32
    %4 = vector.broadcast %c2_i32 : i32 to vector<32x1xi32>
    %5 = arith.cmpi sge, %3, %4 : vector<32x1xi32>
    %c1_i32 = arith.constant 1 : i32
    %6 = vector.broadcast %c1_i32 : i32 to vector<32x1xi32>
    %7 = arith.cmpi sge, %3, %6 : vector<32x1xi32>
    %c0_i32 = arith.constant 0 : i32
    %8 = vector.broadcast %c0_i32 : i32 to vector<32x1xi32>
    %9 = arith.cmpi sle, %3, %8 : vector<32x1xi32>
    %c-1_i32 = arith.constant -1 : i32
    %10 = vector.broadcast %c-1_i32 : i32 to vector<32x1xi32>
    %11 = arith.cmpi sle, %3, %10 : vector<32x1xi32>
    %c0_4 = arith.constant 0 : index
    %c0_5 = arith.constant 0 : index
    %12 = vector.load %arg1[%c0_4, %c0_5] : memref<32x16xf32, #tpu.memory_space<vmem>>, vector<32x16xf32>
    %c8 = arith.constant 8 : index
    %c0_6 = arith.constant 0 : index
    %13 = vector.load %arg6[%c8, %c0_6] : memref<48x128xf32, #tpu.memory_space<vmem>>, vector<32x16xf32>
    tpu.vector_store %arg6[%c8, %c0_6], %12 {strides = array<i32>} : memref<48x128xf32, #tpu.memory_space<vmem>>, vector<32x16xf32>,
    %c7 = arith.constant 7 : index
    %c0_7 = arith.constant 0 : index
    %14 = vector.load %arg6[%c7, %c0_7] : memref<48x128xf32, #tpu.memory_space<vmem>>, vector<32x16xf32>
    %cst_8 = arith.constant 0.000000e+00 : f32
    %15 = vector.shape_cast %7 : vector<32x1xi1> to vector<32x1xi1>
    %16 = vector.broadcast %15 : vector<32x1xi1> to vector<32x16xi1>
    %17 = vector.broadcast %cst_8 : f32 to vector<32x16xf32>
    %18 = arith.select %16, %14, %17 : vector<32x16xi1>, vector<32x16xf32>
    %c8_9 = arith.constant 8 : index
    %c0_10 = arith.constant 0 : index
    %19 = vector.load %arg6[%c8_9, %c0_10] : memref<48x128xf32, #tpu.memory_space<vmem>>, vector<32x16xf32>
    %c9 = arith.constant 9 : index
    %c0_11 = arith.constant 0 : index
    %20 = vector.load %arg6[%c9, %c0_11] : memref<48x128xf32, #tpu.memory_space<vmem>>, vector<32x16xf32>
    %cst_12 = arith.constant 0.000000e+00 : f32
    %21 = vector.shape_cast %9 : vector<32x1xi1> to vector<32x1xi1>
    %22 = vector.broadcast %21 : vector<32x1xi1> to vector<32x16xi1>
    %23 = vector.broadcast %cst_12 : f32 to vector<32x16xf32>
    %24 = arith.select %22, %20, %23 : vector<32x16xi1>, vector<32x16xf32>
    %25 = tpu.concatenate %18, %19, %24 in 1 : vector<32x16xf32>, vector<32x16xf32>, vector<32x16xf32> -> vector<32x48xf32>
    %c0_13 = arith.constant 0 : index
    %c0_14 = arith.constant 0 : index
    %26 = vector.load %arg2[%c0_13, %c0_14] : memref<1192x256xf32, #tpu.memory_space<vmem>>, vector<48x32xf32>
    %cst_15 = arith.constant dense<0.000000e+00> : vector<32x32xf32>
    %27 = tpu.matmul %25, %26, %cst_15 {dimension_numbers = #tpu.dot_dimension_numbers<[1], [0], [0], [1], [0, 0, 1, 1], [], []>} : vector<32x48xf32>, vector<48x32xf32>, vector<32x32xf32> -> vector<32x32xf32>
    %28 = vector.extract_strided_slice %27 {offsets = [0, 0], sizes = [32, 16], strides = [1, 1]} : vector<32x32xf32> to vector<32x16xf32>
    %29 = vector.extract_strided_slice %27 {offsets = [0, 16], sizes = [32, 16], strides = [1, 1]} : vector<32x32xf32> to vector<32x16xf32>
    %30 = arith.maximumf %28, %29 : vector<32x16xf32>
    %c0_16 = arith.constant 0 : index
    %c0_17 = arith.constant 0 : index
    %31 = vector.load %arg3[%c0_16, %c0_17] : memref<16x128xf32, #tpu.memory_space<vmem>>, vector<1x16xf32>
    %c4 = arith.constant 4 : index
    %c0_18 = arith.constant 0 : index
    %32 = vector.load %arg3[%c4, %c0_18] : memref<16x128xf32, #tpu.memory_space<vmem>>, vector<1x16xf32>
    %33 = vector.broadcast %31 : vector<1x16xf32> to vector<32x16xf32>
    %34 = arith.mulf %30, %33 : vector<32x16xf32>
    %35 = vector.broadcast %32 : vector<1x16xf32> to vector<32x16xf32>
    %36 = arith.addf %34, %35 : vector<32x16xf32>
    %cst_19 = arith.constant 0.000000e+00 : f32
    %37 = vector.broadcast %cst_19 : f32 to vector<32x16xf32>
    %38 = arith.maximumf %36, %37 : vector<32x16xf32>
    %c8_20 = arith.constant 8 : index
    %c0_21 = arith.constant 0 : index
    %39 = vector.load %arg6[%c8_20, %c0_21] : memref<48x128xf32, #tpu.memory_space<vmem>>, vector<32x16xf32>
    tpu.vector_store %arg6[%c8_20, %c0_21], %38 {strides = array<i32>} : memref<48x128xf32, #tpu.memory_space<vmem>>, vector<32x16xf32>,
    %c7_22 = arith.constant 7 : index
    %c0_23 = arith.constant 0 : index
    %40 = vector.load %arg6[%c7_22, %c0_23] : memref<48x128xf32, #tpu.memory_space<vmem>>, vector<32x16xf32>
    %cst_24 = arith.constant 0.000000e+00 : f32
    %41 = vector.shape_cast %7 : vector<32x1xi1> to vector<32x1xi1>
    %42 = vector.broadcast %41 : vector<32x1xi1> to vector<32x16xi1>
    %43 = vector.broadcast %cst_24 : f32 to vector<32x16xf32>
    %44 = arith.select %42, %40, %43 : vector<32x16xi1>, vector<32x16xf32>
    %c8_25 = arith.constant 8 : index
    %c0_26 = arith.constant 0 : index
    %45 = vector.load %arg6[%c8_25, %c0_26] : memref<48x128xf32, #tpu.memory_space<vmem>>, vector<32x16xf32>
    %c9_27 = arith.constant 9 : index
    %c0_28 = arith.constant 0 : index
    %46 = vector.load %arg6[%c9_27, %c0_28] : memref<48x128xf32, #tpu.memory_space<vmem>>, vector<32x16xf32>
    %cst_29 = arith.constant 0.000000e+00 : f32
    %47 = vector.shape_cast %9 : vector<32x1xi1> to vector<32x1xi1>
    %48 = vector.broadcast %47 : vector<32x1xi1> to vector<32x16xi1>
    %49 = vector.broadcast %cst_29 : f32 to vector<32x16xf32>
    %50 = arith.select %48, %46, %49 : vector<32x16xi1>, vector<32x16xf32>
    %51 = tpu.concatenate %44, %45, %50 in 1 : vector<32x16xf32>, vector<32x16xf32>, vector<32x16xf32> -> vector<32x48xf32>
    %c48 = arith.constant 48 : index
    %c0_30 = arith.constant 0 : index
    %52 = vector.load %arg2[%c48, %c0_30] : memref<1192x256xf32, #tpu.memory_space<vmem>>, vector<48x64xf32>
    %cst_31 = arith.constant dense<0.000000e+00> : vector<32x64xf32>
    %53 = tpu.matmul %51, %52, %cst_31 {dimension_numbers = #tpu.dot_dimension_numbers<[1], [0], [0], [1], [0, 0, 1, 1], [], []>} : vector<32x48xf32>, vector<48x64xf32>, vector<32x64xf32> -> vector<32x64xf32>
    %54 = vector.extract_strided_slice %53 {offsets = [0, 0], sizes = [32, 32], strides = [1, 1]} : vector<32x64xf32> to vector<32x32xf32>
    %55 = vector.extract_strided_slice %53 {offsets = [0, 32], sizes = [32, 32], strides = [1, 1]} : vector<32x64xf32> to vector<32x32xf32>
    %56 = arith.maximumf %54, %55 : vector<32x32xf32>
    %c1 = arith.constant 1 : index
    %c0_32 = arith.constant 0 : index
    %57 = vector.load %arg3[%c1, %c0_32] : memref<16x128xf32, #tpu.memory_space<vmem>>, vector<1x32xf32>
    %c5 = arith.constant 5 : index
    %c0_33 = arith.constant 0 : index
    %58 = vector.load %arg3[%c5, %c0_33] : memref<16x128xf32, #tpu.memory_space<vmem>>, vector<1x32xf32>
    %59 = vector.broadcast %57 : vector<1x32xf32> to vector<32x32xf32>
    %60 = arith.mulf %56, %59 : vector<32x32xf32>
    %61 = vector.broadcast %58 : vector<1x32xf32> to vector<32x32xf32>
    %62 = arith.addf %60, %61 : vector<32x32xf32>
    %cst_34 = arith.constant 0.000000e+00 : f32
    %63 = vector.broadcast %cst_34 : f32 to vector<32x32xf32>
    %64 = arith.maximumf %62, %63 : vector<32x32xf32>
    %c8_35 = arith.constant 8 : index
    %c0_36 = arith.constant 0 : index
    %65 = vector.load %arg6[%c8_35, %c0_36] : memref<48x128xf32, #tpu.memory_space<vmem>>, vector<32x32xf32>
    tpu.vector_store %arg6[%c8_35, %c0_36], %64 {strides = array<i32>} : memref<48x128xf32, #tpu.memory_space<vmem>>, vector<32x32xf32>,
    %c7_37 = arith.constant 7 : index
    %c0_38 = arith.constant 0 : index
    %66 = vector.load %arg6[%c7_37, %c0_38] : memref<48x128xf32, #tpu.memory_space<vmem>>, vector<32x32xf32>
    %cst_39 = arith.constant 0.000000e+00 : f32
    %67 = vector.shape_cast %7 : vector<32x1xi1> to vector<32x1xi1>
    %68 = vector.broadcast %67 : vector<32x1xi1> to vector<32x32xi1>
    %69 = vector.broadcast %cst_39 : f32 to vector<32x32xf32>
    %70 = arith.select %68, %66, %69 : vector<32x32xi1>, vector<32x32xf32>
    %c8_40 = arith.constant 8 : index
    %c0_41 = arith.constant 0 : index
    %71 = vector.load %arg6[%c8_40, %c0_41] : memref<48x128xf32, #tpu.memory_space<vmem>>, vector<32x32xf32>
    %c9_42 = arith.constant 9 : index
    %c0_43 = arith.constant 0 : index
    %72 = vector.load %arg6[%c9_42, %c0_43] : memref<48x128xf32, #tpu.memory_space<vmem>>, vector<32x32xf32>
    %cst_44 = arith.constant 0.000000e+00 : f32
    %73 = vector.shape_cast %9 : vector<32x1xi1> to vector<32x1xi1>
    %74 = vector.broadcast %73 : vector<32x1xi1> to vector<32x32xi1>
    %75 = vector.broadcast %cst_44 : f32 to vector<32x32xf32>
    %76 = arith.select %74, %72, %75 : vector<32x32xi1>, vector<32x32xf32>
    %77 = tpu.concatenate %70, %71, %76 in 1 : vector<32x32xf32>, vector<32x32xf32>, vector<32x32xf32> -> vector<32x96xf32>
    %c96 = arith.constant 96 : index
    %c0_45 = arith.constant 0 : index
    %78 = vector.load %arg2[%c96, %c0_45] : memref<1192x256xf32, #tpu.memory_space<vmem>>, vector<96x128xf32>
    %cst_46 = arith.constant dense<0.000000e+00> : vector<32x128xf32>
    %79 = tpu.matmul %77, %78, %cst_46 {dimension_numbers = #tpu.dot_dimension_numbers<[1], [0], [0], [1], [0, 0, 1, 1], [], []>} : vector<32x96xf32>, vector<96x128xf32>, vector<32x128xf32> -> vector<32x128xf32>
    %80 = vector.extract_strided_slice %79 {offsets = [0, 0], sizes = [32, 64], strides = [1, 1]} : vector<32x128xf32> to vector<32x64xf32>
    %81 = vector.extract_strided_slice %79 {offsets = [0, 64], sizes = [32, 64], strides = [1, 1]} : vector<32x128xf32> to vector<32x64xf32>
    %82 = arith.maximumf %80, %81 : vector<32x64xf32>
    %c2 = arith.constant 2 : index
    %c0_47 = arith.constant 0 : index
    %83 = vector.load %arg3[%c2, %c0_47] : memref<16x128xf32, #tpu.memory_space<vmem>>, vector<1x64xf32>
    %c6 = arith.constant 6 : index
    %c0_48 = arith.constant 0 : index
    %84 = vector.load %arg3[%c6, %c0_48] : memref<16x128xf32, #tpu.memory_space<vmem>>, vector<1x64xf32>
    %85 = vector.broadcast %83 : vector<1x64xf32> to vector<32x64xf32>
    %86 = arith.mulf %82, %85 : vector<32x64xf32>
    %87 = vector.broadcast %84 : vector<1x64xf32> to vector<32x64xf32>
    %88 = arith.addf %86, %87 : vector<32x64xf32>
    %cst_49 = arith.constant 0.000000e+00 : f32
    %89 = vector.broadcast %cst_49 : f32 to vector<32x64xf32>
    %90 = arith.maximumf %88, %89 : vector<32x64xf32>
    %c8_50 = arith.constant 8 : index
    %c0_51 = arith.constant 0 : index
    %91 = vector.load %arg6[%c8_50, %c0_51] : memref<48x128xf32, #tpu.memory_space<vmem>>, vector<32x64xf32>
    tpu.vector_store %arg6[%c8_50, %c0_51], %90 {strides = array<i32>} : memref<48x128xf32, #tpu.memory_space<vmem>>, vector<32x64xf32>,
    %c7_52 = arith.constant 7 : index
    %c0_53 = arith.constant 0 : index
    %92 = vector.load %arg6[%c7_52, %c0_53] : memref<48x128xf32, #tpu.memory_space<vmem>>, vector<32x64xf32>
    %cst_54 = arith.constant 0.000000e+00 : f32
    %93 = vector.shape_cast %7 : vector<32x1xi1> to vector<32x1xi1>
    %94 = vector.broadcast %93 : vector<32x1xi1> to vector<32x64xi1>
    %95 = vector.broadcast %cst_54 : f32 to vector<32x64xf32>
    %96 = arith.select %94, %92, %95 : vector<32x64xi1>, vector<32x64xf32>
    %c8_55 = arith.constant 8 : index
    %c0_56 = arith.constant 0 : index
    %97 = vector.load %arg6[%c8_55, %c0_56] : memref<48x128xf32, #tpu.memory_space<vmem>>, vector<32x64xf32>
    %c9_57 = arith.constant 9 : index
    %c0_58 = arith.constant 0 : index
    %98 = vector.load %arg6[%c9_57, %c0_58] : memref<48x128xf32, #tpu.memory_space<vmem>>, vector<32x64xf32>
    %cst_59 = arith.constant 0.000000e+00 : f32
    %99 = vector.shape_cast %9 : vector<32x1xi1> to vector<32x1xi1>
    %100 = vector.broadcast %99 : vector<32x1xi1> to vector<32x64xi1>
    %101 = vector.broadcast %cst_59 : f32 to vector<32x64xf32>
    %102 = arith.select %100, %98, %101 : vector<32x64xi1>, vector<32x64xf32>
    %103 = tpu.concatenate %96, %97, %102 in 1 : vector<32x64xf32>, vector<32x64xf32>, vector<32x64xf32> -> vector<32x192xf32>
    %c192 = arith.constant 192 : index
    %c0_60 = arith.constant 0 : index
    %104 = vector.load %arg2[%c192, %c0_60] : memref<1192x256xf32, #tpu.memory_space<vmem>>, vector<192x256xf32>
    %cst_61 = arith.constant dense<0.000000e+00> : vector<32x256xf32>
    %105 = tpu.matmul %103, %104, %cst_61 {dimension_numbers = #tpu.dot_dimension_numbers<[1], [0], [0], [1], [0, 0, 1, 1], [], []>} : vector<32x192xf32>, vector<192x256xf32>, vector<32x256xf32> -> vector<32x256xf32>
    %106 = vector.extract_strided_slice %105 {offsets = [0, 0], sizes = [32, 128], strides = [1, 1]} : vector<32x256xf32> to vector<32x128xf32>
    %107 = vector.extract_strided_slice %105 {offsets = [0, 128], sizes = [32, 128], strides = [1, 1]} : vector<32x256xf32> to vector<32x128xf32>
    %108 = arith.maximumf %106, %107 : vector<32x128xf32>
    %c3 = arith.constant 3 : index
    %c0_62 = arith.constant 0 : index
    %109 = vector.load %arg3[%c3, %c0_62] : memref<16x128xf32, #tpu.memory_space<vmem>>, vector<1x128xf32>
    %c7_63 = arith.constant 7 : index
    %c0_64 = arith.constant 0 : index
    %110 = vector.load %arg3[%c7_63, %c0_64] : memref<16x128xf32, #tpu.memory_space<vmem>>, vector<1x128xf32>
    %111 = vector.broadcast %109 : vector<1x128xf32> to vector<32x128xf32>
    %112 = arith.mulf %108, %111 : vector<32x128xf32>
    %113 = vector.broadcast %110 : vector<1x128xf32> to vector<32x128xf32>
    %114 = arith.addf %112, %113 : vector<32x128xf32>
    %cst_65 = arith.constant 0.000000e+00 : f32
    %115 = vector.broadcast %cst_65 : f32 to vector<32x128xf32>
    %116 = arith.maximumf %114, %115 : vector<32x128xf32>
    %c8_66 = arith.constant 8 : index
    %c0_67 = arith.constant 0 : index
    %117 = vector.load %arg6[%c8_66, %c0_67] : memref<48x128xf32, #tpu.memory_space<vmem>>, vector<32x128xf32>
    tpu.vector_store %arg6[%c8_66, %c0_67], %116 {strides = array<i32>} : memref<48x128xf32, #tpu.memory_space<vmem>>, vector<32x128xf32>,
    %c6_68 = arith.constant 6 : index
    %c0_69 = arith.constant 0 : index
    %118 = vector.load %arg6[%c6_68, %c0_69] : memref<48x128xf32, #tpu.memory_space<vmem>>, vector<32x128xf32>
    %cst_70 = arith.constant 0.000000e+00 : f32
    %119 = vector.shape_cast %5 : vector<32x1xi1> to vector<32x1xi1>
    %120 = vector.broadcast %119 : vector<32x1xi1> to vector<32x128xi1>
    %121 = vector.broadcast %cst_70 : f32 to vector<32x128xf32>
    %122 = arith.select %120, %118, %121 : vector<32x128xi1>, vector<32x128xf32>
    %c7_71 = arith.constant 7 : index
    %c0_72 = arith.constant 0 : index
    %123 = vector.load %arg6[%c7_71, %c0_72] : memref<48x128xf32, #tpu.memory_space<vmem>>, vector<32x128xf32>
    %cst_73 = arith.constant 0.000000e+00 : f32
    %124 = vector.shape_cast %7 : vector<32x1xi1> to vector<32x1xi1>
    %125 = vector.broadcast %124 : vector<32x1xi1> to vector<32x128xi1>
    %126 = vector.broadcast %cst_73 : f32 to vector<32x128xf32>
    %127 = arith.select %125, %123, %126 : vector<32x128xi1>, vector<32x128xf32>
    %c8_74 = arith.constant 8 : index
    %c0_75 = arith.constant 0 : index
    %128 = vector.load %arg6[%c8_74, %c0_75] : memref<48x128xf32, #tpu.memory_space<vmem>>, vector<32x128xf32>
    %c9_76 = arith.constant 9 : index
    %c0_77 = arith.constant 0 : index
    %129 = vector.load %arg6[%c9_76, %c0_77] : memref<48x128xf32, #tpu.memory_space<vmem>>, vector<32x128xf32>
    %cst_78 = arith.constant 0.000000e+00 : f32
    %130 = vector.shape_cast %9 : vector<32x1xi1> to vector<32x1xi1>
    %131 = vector.broadcast %130 : vector<32x1xi1> to vector<32x128xi1>
    %132 = vector.broadcast %cst_78 : f32 to vector<32x128xf32>
    %133 = arith.select %131, %129, %132 : vector<32x128xi1>, vector<32x128xf32>
    %c10 = arith.constant 10 : index
    %c0_79 = arith.constant 0 : index
    %134 = vector.load %arg6[%c10, %c0_79] : memref<48x128xf32, #tpu.memory_space<vmem>>, vector<32x128xf32>
    %cst_80 = arith.constant 0.000000e+00 : f32
    %135 = vector.shape_cast %11 : vector<32x1xi1> to vector<32x1xi1>
    %136 = vector.broadcast %135 : vector<32x1xi1> to vector<32x128xi1>
    %137 = vector.broadcast %cst_80 : f32 to vector<32x128xf32>
    %138 = arith.select %136, %134, %137 : vector<32x128xi1>, vector<32x128xf32>
    %139 = tpu.concatenate %122, %127, %128, %133, %138 in 1 : vector<32x128xf32>, vector<32x128xf32>, vector<32x128xf32>, vector<32x128xf32>, vector<32x128xf32> -> vector<32x640xf32>
    %c384 = arith.constant 384 : index
    %c0_81 = arith.constant 0 : index
    %140 = vector.load %arg2[%c384, %c0_81] : memref<1192x256xf32, #tpu.memory_space<vmem>>, vector<640x32xf32>
    %cst_82 = arith.constant dense<0.000000e+00> : vector<32x32xf32>
    %141 = tpu.matmul %139, %140, %cst_82 {dimension_numbers = #tpu.dot_dimension_numbers<[1], [0], [0], [1], [0, 0, 1, 1], [], []>} : vector<32x640xf32>, vector<640x32xf32>, vector<32x32xf32> -> vector<32x32xf32>
    %c8_83 = arith.constant 8 : index
    %c0_84 = arith.constant 0 : index
    %142 = vector.load %arg3[%c8_83, %c0_84] : memref<16x128xf32, #tpu.memory_space<vmem>>, vector<1x32xf32>
    %143 = vector.broadcast %142 : vector<1x32xf32> to vector<32x32xf32>
    %144 = arith.addf %141, %143 : vector<32x32xf32>
    %cst_85 = arith.constant 0.000000e+00 : f32
    %145 = vector.broadcast %cst_85 : f32 to vector<32x32xf32>
    %146 = arith.maximumf %144, %145 : vector<32x32xf32>
    %c8_86 = arith.constant 8 : index
    %c0_87 = arith.constant 0 : index
    %147 = vector.load %arg6[%c8_86, %c0_87] : memref<48x128xf32, #tpu.memory_space<vmem>>, vector<32x32xf32>
    tpu.vector_store %arg6[%c8_86, %c0_87], %146 {strides = array<i32>} : memref<48x128xf32, #tpu.memory_space<vmem>>, vector<32x32xf32>,
    %c7_88 = arith.constant 7 : index
    %c0_89 = arith.constant 0 : index
    %148 = vector.load %arg6[%c7_88, %c0_89] : memref<48x128xf32, #tpu.memory_space<vmem>>, vector<32x32xf32>
    %cst_90 = arith.constant 0.000000e+00 : f32
    %149 = vector.shape_cast %7 : vector<32x1xi1> to vector<32x1xi1>
    %150 = vector.broadcast %149 : vector<32x1xi1> to vector<32x32xi1>
    %151 = vector.broadcast %cst_90 : f32 to vector<32x32xf32>
    %152 = arith.select %150, %148, %151 : vector<32x32xi1>, vector<32x32xf32>
    %c8_91 = arith.constant 8 : index
    %c0_92 = arith.constant 0 : index
    %153 = vector.load %arg6[%c8_91, %c0_92] : memref<48x128xf32, #tpu.memory_space<vmem>>, vector<32x32xf32>
    %c9_93 = arith.constant 9 : index
    %c0_94 = arith.constant 0 : index
    %154 = vector.load %arg6[%c9_93, %c0_94] : memref<48x128xf32, #tpu.memory_space<vmem>>, vector<32x32xf32>
    %cst_95 = arith.constant 0.000000e+00 : f32
    %155 = vector.shape_cast %9 : vector<32x1xi1> to vector<32x1xi1>
    %156 = vector.broadcast %155 : vector<32x1xi1> to vector<32x32xi1>
    %157 = vector.broadcast %cst_95 : f32 to vector<32x32xf32>
    %158 = arith.select %156, %154, %157 : vector<32x32xi1>, vector<32x32xf32>
    %159 = tpu.concatenate %152, %153, %158 in 1 : vector<32x32xf32>, vector<32x32xf32>, vector<32x32xf32> -> vector<32x96xf32>
    %c1024 = arith.constant 1024 : index
    %c0_96 = arith.constant 0 : index
    %160 = vector.load %arg2[%c1024, %c0_96] : memref<1192x256xf32, #tpu.memory_space<vmem>>, vector<96x16xf32>
    %cst_97 = arith.constant dense<0.000000e+00> : vector<32x16xf32>
    %161 = tpu.matmul %159, %160, %cst_97 {dimension_numbers = #tpu.dot_dimension_numbers<[1], [0], [0], [1], [0, 0, 1, 1], [], []>} : vector<32x96xf32>, vector<96x16xf32>, vector<32x16xf32> -> vector<32x16xf32>
    %c9_98 = arith.constant 9 : index
    %c0_99 = arith.constant 0 : index
    %162 = vector.load %arg3[%c9_98, %c0_99] : memref<16x128xf32, #tpu.memory_space<vmem>>, vector<1x16xf32>
    %163 = vector.broadcast %162 : vector<1x16xf32> to vector<32x16xf32>
    %164 = arith.addf %161, %163 : vector<32x16xf32>
    %cst_100 = arith.constant 0.000000e+00 : f32
    %165 = vector.broadcast %cst_100 : f32 to vector<32x16xf32>
    %166 = arith.maximumf %164, %165 : vector<32x16xf32>
    %c8_101 = arith.constant 8 : index
    %c0_102 = arith.constant 0 : index
    %167 = vector.load %arg6[%c8_101, %c0_102] : memref<48x128xf32, #tpu.memory_space<vmem>>, vector<32x16xf32>
    tpu.vector_store %arg6[%c8_101, %c0_102], %166 {strides = array<i32>} : memref<48x128xf32, #tpu.memory_space<vmem>>, vector<32x16xf32>,
    %c7_103 = arith.constant 7 : index
    %c0_104 = arith.constant 0 : index
    %168 = vector.load %arg6[%c7_103, %c0_104] : memref<48x128xf32, #tpu.memory_space<vmem>>, vector<32x16xf32>
    %cst_105 = arith.constant 0.000000e+00 : f32
    %169 = vector.shape_cast %7 : vector<32x1xi1> to vector<32x1xi1>
    %170 = vector.broadcast %169 : vector<32x1xi1> to vector<32x16xi1>
    %171 = vector.broadcast %cst_105 : f32 to vector<32x16xf32>
    %172 = arith.select %170, %168, %171 : vector<32x16xi1>, vector<32x16xf32>
    %c8_106 = arith.constant 8 : index
    %c0_107 = arith.constant 0 : index
    %173 = vector.load %arg6[%c8_106, %c0_107] : memref<48x128xf32, #tpu.memory_space<vmem>>, vector<32x16xf32>
    %c9_108 = arith.constant 9 : index
    %c0_109 = arith.constant 0 : index
    %174 = vector.load %arg6[%c9_108, %c0_109] : memref<48x128xf32, #tpu.memory_space<vmem>>, vector<32x16xf32>
    %cst_110 = arith.constant 0.000000e+00 : f32
    %175 = vector.shape_cast %9 : vector<32x1xi1> to vector<32x1xi1>
    %176 = vector.broadcast %175 : vector<32x1xi1> to vector<32x16xi1>
    %177 = vector.broadcast %cst_110 : f32 to vector<32x16xf32>
    %178 = arith.select %176, %174, %177 : vector<32x16xi1>, vector<32x16xf32>
    %179 = tpu.concatenate %172, %173, %178 in 1 : vector<32x16xf32>, vector<32x16xf32>, vector<32x16xf32> -> vector<32x48xf32>
    %c1120 = arith.constant 1120 : index
    %c0_111 = arith.constant 0 : index
    %180 = vector.load %arg2[%c1120, %c0_111] : memref<1192x256xf32, #tpu.memory_space<vmem>>, vector<48x8xf32>
    %cst_112 = arith.constant dense<0.000000e+00> : vector<32x8xf32>
    %181 = tpu.matmul %179, %180, %cst_112 {dimension_numbers = #tpu.dot_dimension_numbers<[1], [0], [0], [1], [0, 0, 1, 1], [], []>} : vector<32x48xf32>, vector<48x8xf32>, vector<32x8xf32> -> vector<32x8xf32>
    %c10_113 = arith.constant 10 : index
    %c0_114 = arith.constant 0 : index
    %182 = vector.load %arg3[%c10_113, %c0_114] : memref<16x128xf32, #tpu.memory_space<vmem>>, vector<1x8xf32>
    %183 = vector.broadcast %182 : vector<1x8xf32> to vector<32x8xf32>
    %184 = arith.addf %181, %183 : vector<32x8xf32>
    %cst_115 = arith.constant 0.000000e+00 : f32
    %185 = vector.broadcast %cst_115 : f32 to vector<32x8xf32>
    %186 = arith.maximumf %184, %185 : vector<32x8xf32>
    %c8_116 = arith.constant 8 : index
    %c0_117 = arith.constant 0 : index
    %187 = vector.load %arg6[%c8_116, %c0_117] : memref<48x128xf32, #tpu.memory_space<vmem>>, vector<32x8xf32>
    tpu.vector_store %arg6[%c8_116, %c0_117], %186 {strides = array<i32>} : memref<48x128xf32, #tpu.memory_space<vmem>>, vector<32x8xf32>,
    %c7_118 = arith.constant 7 : index
    %c0_119 = arith.constant 0 : index
    %188 = vector.load %arg6[%c7_118, %c0_119] : memref<48x128xf32, #tpu.memory_space<vmem>>, vector<32x8xf32>
    %cst_120 = arith.constant 0.000000e+00 : f32
    %189 = vector.shape_cast %7 : vector<32x1xi1> to vector<32x1xi1>
    %190 = vector.broadcast %189 : vector<32x1xi1> to vector<32x8xi1>
    %191 = vector.broadcast %cst_120 : f32 to vector<32x8xf32>
    %192 = arith.select %190, %188, %191 : vector<32x8xi1>, vector<32x8xf32>
    %c8_121 = arith.constant 8 : index
    %c0_122 = arith.constant 0 : index
    %193 = vector.load %arg6[%c8_121, %c0_122] : memref<48x128xf32, #tpu.memory_space<vmem>>, vector<32x8xf32>
    %c9_123 = arith.constant 9 : index
    %c0_124 = arith.constant 0 : index
    %194 = vector.load %arg6[%c9_123, %c0_124] : memref<48x128xf32, #tpu.memory_space<vmem>>, vector<32x8xf32>
    %cst_125 = arith.constant 0.000000e+00 : f32
    %195 = vector.shape_cast %9 : vector<32x1xi1> to vector<32x1xi1>
    %196 = vector.broadcast %195 : vector<32x1xi1> to vector<32x8xi1>
    %197 = vector.broadcast %cst_125 : f32 to vector<32x8xf32>
    %198 = arith.select %196, %194, %197 : vector<32x8xi1>, vector<32x8xf32>
    %199 = tpu.concatenate %192, %193, %198 in 1 : vector<32x8xf32>, vector<32x8xf32>, vector<32x8xf32> -> vector<32x24xf32>
    %c1168 = arith.constant 1168 : index
    %c0_126 = arith.constant 0 : index
    %200 = vector.load %arg2[%c1168, %c0_126] : memref<1192x256xf32, #tpu.memory_space<vmem>>, vector<24x16xf32>
    %cst_127 = arith.constant dense<0.000000e+00> : vector<32x16xf32>
    %201 = tpu.matmul %199, %200, %cst_127 {dimension_numbers = #tpu.dot_dimension_numbers<[1], [0], [0], [1], [0, 0, 1, 1], [], []>} : vector<32x24xf32>, vector<24x16xf32>, vector<32x16xf32> -> vector<32x16xf32>
    %c11 = arith.constant 11 : index
    %c0_128 = arith.constant 0 : index
    %202 = vector.load %arg3[%c11, %c0_128] : memref<16x128xf32, #tpu.memory_space<vmem>>, vector<1x16xf32>
    %203 = vector.broadcast %202 : vector<1x16xf32> to vector<32x16xf32>
    %204 = arith.addf %201, %203 : vector<32x16xf32>
    %cst_129 = arith.constant 0.000000e+00 : f32
    %205 = vector.broadcast %cst_129 : f32 to vector<32x16xf32>
    %206 = arith.maximumf %204, %205 : vector<32x16xf32>
    %c0_130 = arith.constant 0 : index
    %c0_131 = arith.constant 0 : index
    %207 = vector.load %arg5[%c0_130, %c0_131] : memref<32x16xf32, #tpu.memory_space<vmem>>, vector<32x16xf32>
    tpu.vector_store %arg5[%c0_130, %c0_131], %206 {strides = array<i32>} : memref<32x16xf32, #tpu.memory_space<vmem>>, vector<32x16xf32>,
    return
  }
  func.func @transform_0(%arg0: i32) -> (i32, i32) {
    %c0_i32 = arith.constant 0 : i32
    %c0_i32_0 = arith.constant 0 : i32
    return %arg0, %c0_i32 : i32, i32
  }
  func.func @transform_1(%arg0: i32) -> (i32, i32) {
    %c0_i32 = arith.constant 0 : i32
    %c0_i32_0 = arith.constant 0 : i32
    %c0_i32_1 = arith.constant 0 : i32
    return %c0_i32, %c0_i32_0 : i32, i32
  }
  func.func @transform_2(%arg0: i32) -> (i32, i32) {
    %c0_i32 = arith.constant 0 : i32
    %c0_i32_0 = arith.constant 0 : i32
    %c0_i32_1 = arith.constant 0 : i32
    return %c0_i32, %c0_i32_0 : i32, i32
  }
  func.func @transform_3(%arg0: i32) -> (i32, i32) {
    %c0_i32 = arith.constant 0 : i32
    %c0_i32_0 = arith.constant 0 : i32
    %c0_i32_1 = arith.constant 0 : i32
    return %c0_i32, %c0_i32_0 : i32, i32
  }
  func.func @transform_4(%arg0: i32) -> (i32, i32) {
    %c0_i32 = arith.constant 0 : i32
    %c0_i32_0 = arith.constant 0 : i32
    return %arg0, %c0_i32 : i32, i32
  }
}

</mosaic_0001>

<llo_original>
// kernel: tpu_custom_call.1
$region0: #{tpu_custom_call.1}
  #allocation0 [shape = 'u32[]', space=smem, size = 0x4, offset = 0x4, fixed_abs, tag = 'smem constant byte address 0x4 - core index']
  #allocation1 [shape = 'u32[144,128]{1,0:T(1,128)}', space=vmem, size = 0x12000, scoped, tag = 'internal scratch']
  #allocation2 [shape = 'f32[48,128]{1,0:T(8,128)}', space=vmem, size = 0x6000, scoped, tag = 'scratch operand']
  %s0 = inlined_call_operand.vmem [shape: f32[32,16], index: 0, kind: input, shape index: {}]
  %s1 = inlined_call_operand.hbm [shape: f32[1192,256], index: 1, kind: input, shape index: {}]
  %s2 = inlined_call_operand.hbm [shape: f32[16,128], index: 2, kind: input, shape index: {}]
  %s3 = inlined_call_operand.vmem [shape: s32[32,1], index: 3, kind: input, shape index: {}]
  %s4 = inlined_call_operand.vmem [shape: f32[32,16], index: 4, kind: output, shape index: {}]
  %s5 = sld [smem:[#allocation0]]
  $region34: #{tpu_custom_call.1} parent=0
    _
  %s7 = ssub.s32 1, %s5
  %s8 = scalar_select 0, %s7, %s5
  $region1: #{tpu_custom_call.1} parent=0
    #allocation3 [shape = 'u8[1220608]{0}', space=vmem, size = 0x12a000, scoped, tag = 'input window, operand 1, single buffered']
    #allocation4 [shape = 's32[1]{0}', space=sflag, size = 0x4, scoped, tag = 'scoped memory for tpu_custom_call.1']
    #allocation5 [shape = 'u8[8192]{0}', space=vmem, size = 0x2000, scoped, tag = 'input window, operand 2, single buffered']
    #allocation6 [shape = 's32[1]{0}', space=sflag, size = 0x4, scoped, tag = 'scoped memory for tpu_custom_call.1']
    %9 = vsyncpa [#allocation4], 0
    %10 = vsyncpa [#allocation6], 0
    // Predicated region
    $region2: #{tpu_custom_call.1} parent=1 // pred_check
      _
    $region3: #{tpu_custom_call.1} parent=1 // pred_check_branch
      %12 = sbr.rel (0) target = $region5
    $region4: #{tpu_custom_call.1} parent=1 // pred_region
      _
    $region5: #{tpu_custom_call.1} parent=1 // pred_fallthru
      _
    // Predicated region
    $region6: #{tpu_custom_call.1} parent=1 // pred_check
      _
    $region7: #{tpu_custom_call.1} parent=1 // pred_check_branch
      %14 = sbr.rel (0) target = $region9
    $region8: #{tpu_custom_call.1} parent=1 // pred_region
      %s16 = ssub.s32 38144, 38144
      %17 = vsyncadd [#allocation4], %s16
      %s18 = sshll.u32 [#allocation3], 4
      %s19 = int_to_ptr.vmem [resolvable:$true] %s18
      %24 = dma.hbm_to_vmem [thread:$0]  %s1, 38144, %s19, [#allocation4], 256, 256, 16
    $region9: #{tpu_custom_call.1} parent=1 // pred_fallthru
      _
    // Predicated region
    $region10: #{tpu_custom_call.1} parent=1 // pred_check
      _
    $region11: #{tpu_custom_call.1} parent=1 // pred_check_branch
      %26 = sbr.rel (0) target = $region13
    $region12: #{tpu_custom_call.1} parent=1 // pred_region
      %s28 = ssub.s32 256, 256
      %29 = vsyncadd [#allocation6], %s28
      %s30 = sshll.u32 [#allocation5], 4
      %s31 = int_to_ptr.vmem [resolvable:$true] %s30
      %36 = dma.hbm_to_vmem [thread:$0]  %s2, 256, %s31, [#allocation6], 128, 128, 8
    $region13: #{tpu_custom_call.1} parent=1 // pred_fallthru
      _
    // Predicated region
    $region14: #{tpu_custom_call.1} parent=1 // pred_check
      _
    $region15: #{tpu_custom_call.1} parent=1 // pred_check_branch
      %38 = sbr.rel (0) target = $region17
    $region16: #{tpu_custom_call.1} parent=1 // pred_region
      _
    $region17: #{tpu_custom_call.1} parent=1 // pred_fallthru
      _
    // Predicated region
    $region18: #{tpu_custom_call.1} parent=1 // pred_check
      _
    $region19: #{tpu_custom_call.1} parent=1 // pred_check_branch
      %40 = sbr.rel (0) target = $region21
    $region20: #{tpu_custom_call.1} parent=1 // pred_region
      %41 = dma.done [#allocation4], 38144
    $region21: #{tpu_custom_call.1} parent=1 // pred_fallthru
      _
    // Predicated region
    $region22: #{tpu_custom_call.1} parent=1 // pred_check
      _
    $region23: #{tpu_custom_call.1} parent=1 // pred_check_branch
      %43 = sbr.rel (0) target = $region25
    $region24: #{tpu_custom_call.1} parent=1 // pred_region
      %44 = dma.done [#allocation6], 256
    $region25: #{tpu_custom_call.1} parent=1 // pred_fallthru
      _
    %45 = vst [vmem:[#allocation2] sm:$0xff] 0.0
    %46 = vst [vmem:[#allocation2 + $0x28] sm:$0xff] 0.0
    %v47 = vld [vmem:[%s3] sm:$0xff]
    %v48 = vld [vmem:[%s3 + $0x8] sm:$0xff]
    %v49 = vld [vmem:[%s3 + $0x10] sm:$0xff]
    %v50 = vld [vmem:[%s3 + $0x18] sm:$0xff]
    %vm51 = vcmp.ge.s32.totalorder %v47, 2
    %vm52 = vcmp.ge.s32.totalorder %v48, 2
    %vm53 = vcmp.ge.s32.totalorder %v49, 2
    %vm54 = vcmp.ge.s32.totalorder %v50, 2
    %vm55 = vcmp.ge.s32.totalorder %v47, 1
    %vm56 = vcmp.ge.s32.totalorder %v48, 1
    %vm57 = vcmp.ge.s32.totalorder %v49, 1
    %vm58 = vcmp.ge.s32.totalorder %v50, 1
    %vm59 = vcmp.le.s32.totalorder %v47, 0
    %vm60 = vcmp.le.s32.totalorder %v48, 0
    %vm61 = vcmp.le.s32.totalorder %v49, 0
    %vm62 = vcmp.le.s32.totalorder %v50, 0
    %vm63 = vcmp.le.s32.totalorder %v47, 4294967295
    %vm64 = vcmp.le.s32.totalorder %v48, 4294967295
    %vm65 = vcmp.le.s32.totalorder %v49, 4294967295
    %vm66 = vcmp.le.s32.totalorder %v50, 4294967295
    %v67 = vld [vmem:[%s0] sm:$0xff]
    %v68 = vld [vmem:[%s0 + $0x8] sm:$0xff]
    %v69 = vld [vmem:[%s0 + $0x10] sm:$0xff]
    %v70 = vld [vmem:[%s0 + $0x18] sm:$0xff]
    %vm71 = vcmask 130048
    %72 = vst.msk [vmem:[#allocation2 + $0x8] sm:$0xff] %vm71, %v67
    %73 = vst.msk [vmem:[#allocation2 + $0x10] sm:$0xff] %vm71, %v68
    %74 = vst.msk [vmem:[#allocation2 + $0x18] sm:$0xff] %vm71, %v69
    %75 = vst.msk [vmem:[#allocation2 + $0x20] sm:$0xff] %vm71, %v70
    %v76 = vld [vmem:[#allocation2 + $0x7] sm:$0xff]
    %v77 = vld [vmem:[#allocation2 + $0xf] sm:$0xff]
    %v78 = vld [vmem:[#allocation2 + $0x17] sm:$0xff]
    %v79 = vld [vmem:[#allocation2 + $0x1f] sm:$0xff]
    %v80 = vsel %vm55, 1, 0
    %v81 = vsel %vm56, 1, 0
    %v82 = vsel %vm57, 1, 0
    %v83 = vsel %vm58, 1, 0
    %84 = vset.pattern.permute.xlu0 0
    %85 = vperm.xlu0 %84, %v80
    %v86 = vpop.permute.xlu0 %85
    %87 = vset.pattern.permute.xlu0 0
    %88 = vperm.xlu0 %87, %v81
    %v89 = vpop.permute.xlu0 %88
    %90 = vset.pattern.permute.xlu0 0
    %91 = vperm.xlu0 %90, %v82
    %v92 = vpop.permute.xlu0 %91
    %93 = vset.pattern.permute.xlu0 0
    %94 = vperm.xlu0 %93, %v83
    %v95 = vpop.permute.xlu0 %94
    %vm96 = vcmp.eq.s32.totalorder %v86, 1
    %vm97 = vcmp.eq.s32.totalorder %v89, 1
    %vm98 = vcmp.eq.s32.totalorder %v92, 1
    %vm99 = vcmp.eq.s32.totalorder %v95, 1
    %v100 = vsel %vm96, %v76, 0.0
    %v101 = vsel %vm97, %v77, 0.0
    %v102 = vsel %vm98, %v78, 0.0
    %v103 = vsel %vm99, %v79, 0.0
    %v104 = vld [vmem:[#allocation2 + $0x8] sm:$0xff]
    %v105 = vld [vmem:[#allocation2 + $0x10] sm:$0xff]
    %v106 = vld [vmem:[#allocation2 + $0x18] sm:$0xff]
    %v107 = vld [vmem:[#allocation2 + $0x20] sm:$0xff]
    %v108 = vld [vmem:[#allocation2 + $0x9] sm:$0xff]
    %v109 = vld [vmem:[#allocation2 + $0x11] sm:$0xff]
    %v110 = vld [vmem:[#allocation2 + $0x19] sm:$0xff]
    %v111 = vld [vmem:[#allocation2 + $0x21] sm:$0xff]
    %v112 = vsel %vm59, 1, 0
    %v113 = vsel %vm60, 1, 0
    %v114 = vsel %vm61, 1, 0
    %v115 = vsel %vm62, 1, 0
    %116 = vset.pattern.permute.xlu0 0
    %117 = vperm.xlu0 %116, %v112
    %v118 = vpop.permute.xlu0 %117
    %119 = vset.pattern.permute.xlu0 0
    %120 = vperm.xlu0 %119, %v113
    %v121 = vpop.permute.xlu0 %120
    %122 = vset.pattern.permute.xlu0 0
    %123 = vperm.xlu0 %122, %v114
    %v124 = vpop.permute.xlu0 %123
    %125 = vset.pattern.permute.xlu0 0
    %126 = vperm.xlu0 %125, %v115
    %v127 = vpop.permute.xlu0 %126
    %vm128 = vcmp.eq.s32.totalorder %v118, 1
    %vm129 = vcmp.eq.s32.totalorder %v121, 1
    %vm130 = vcmp.eq.s32.totalorder %v124, 1
    %vm131 = vcmp.eq.s32.totalorder %v127, 1
    %v132 = vsel %vm128, %v108, 0.0
    %v133 = vsel %vm129, %v109, 0.0
    %v134 = vsel %vm130, %v110, 0.0
    %v135 = vsel %vm131, %v111, 0.0
    %140 = vrot.lane.b32.xlu0 %v104, 16
    %v141 = vpop.permute.xlu0 %140
    %142 = vrot.lane.b32.xlu0 %v105, 16
    %v143 = vpop.permute.xlu0 %142
    %144 = vrot.lane.b32.xlu0 %v106, 16
    %v145 = vpop.permute.xlu0 %144
    %146 = vrot.lane.b32.xlu0 %v107, 16
    %v147 = vpop.permute.xlu0 %146
    %156 = vrot.lane.b32.xlu0 %v132, 32
    %v157 = vpop.permute.xlu0 %156
    %158 = vrot.lane.b32.xlu0 %v133, 32
    %v159 = vpop.permute.xlu0 %158
    %160 = vrot.lane.b32.xlu0 %v134, 32
    %v161 = vpop.permute.xlu0 %160
    %162 = vrot.lane.b32.xlu0 %v135, 32
    %v163 = vpop.permute.xlu0 %162
    %v168 = vsel %vm71, %v100, %v141
    %v169 = vsel %vm71, %v101, %v143
    %v170 = vsel %vm71, %v102, %v145
    %v171 = vsel %vm71, %v103, %v147
    %vm172 = vcmask 261120
    %v173 = vsel %vm172, %v168, %v157
    %v174 = vsel %vm172, %v169, %v159
    %v175 = vsel %vm172, %v170, %v161
    %v176 = vsel %vm172, %v171, %v163
    %v177 = vld [vmem:[#allocation3] sm:$0xff]
    %v178 = vld [vmem:[#allocation3 + $0x10] sm:$0xff]
    %v179 = vld [vmem:[#allocation3 + $0x20] sm:$0xff]
    %v180 = vld [vmem:[#allocation3 + $0x30] sm:$0xff]
    %v181 = vld [vmem:[#allocation3 + $0x40] sm:$0xff]
    %v182 = vld [vmem:[#allocation3 + $0x50] sm:$0xff]
    %vm183 = vcmask 392192
    %v185 = vsel %vm183, %v173, 0
    %v188 = vsel %vm183, %v174, 0
    %v191 = vsel %vm183, %v175, 0
    %v194 = vsel %vm183, %v176, 0
    %196 = vmatprep.subr.mxu0 0.0
    %197 = vmatpush1.msra.mxu0 %v177
    %198 = vmatprep.subr.mxu0 0.0
    %199 = vmatpush1.msra.mxu0 %v178
    %200 = vmatprep.subr.mxu0 0.0
    %201 = vmatpush1.msra.mxu0 %v179
    %202 = vmatprep.subr.mxu0 0.0
    %203 = vmatpush1.msra.mxu0 %v180
    %204 = vmatprep.subr.mxu0 0.0
    %205 = vmatpush1.msra.mxu0 %v181
    %206 = vmatprep.subr.mxu0 0.0
    %207 = vmatpush1.msra.mxu0 %v182
    %208 = vmatprep.subr.mxu0 0.0
    %209 = vmatpush1.msra.mxu0 0.0
    %210 = vmatprep.subr.mxu0 0.0
    %211 = vmatpush1.msra.mxu0 0.0
    %212 = vmatprep.subr.mxu0 0.0
    %213 = vmatpush1.msra.mxu0 0.0
    %214 = vmatprep.subr.mxu0 0.0
    %215 = vmatpush1.msra.mxu0 0.0
    %216 = vmatprep.subr.mxu0 0.0
    %217 = vmatpush1.msra.mxu0 0.0
    %218 = vmatprep.subr.mxu0 0.0
    %219 = vmatpush1.msra.mxu0 0.0
    %220 = vmatprep.subr.mxu0 0.0
    %221 = vmatpush1.msra.mxu0 0.0
    %222 = vmatprep.subr.mxu0 0.0
    %223 = vmatpush1.msra.mxu0 0.0
    %224 = vmatprep.subr.mxu0 0.0
    %225 = vmatpush1.msra.mxu0 0.0
    %226 = vmatprep.subr.mxu0 0.0
    %227 = vmatpush1.msra.mxu0 0.0
    %228 = vmatprep.subr.mxu0 0.0
    %229 = vmatpush1.msra.mxu0 0.0
    %230 = vmatprep.subr.mxu0 0.0
    %231 = vmatpush1.msra.mxu0 0.0
    %232 = vmatprep.subr.mxu0 0.0
    %233 = vmatpush1.msra.mxu0 0.0
    %234 = vmatprep.subr.mxu0 0.0
    %235 = vmatpush1.msra.mxu0 0.0
    %236 = vmatprep.subr.mxu0 0.0
    %237 = vmatpush1.msra.mxu0 0.0
    %238 = vmatprep.subr.mxu0 0.0
    %239 = vmatpush1.msra.mxu0 0.0
    %240 = vmatprep.subr.mxu0 0.0
    %241 = vmatpush1.msra.mxu0 0.0
    %242 = vmatprep.subr.mxu0 0.0
    %243 = vmatpush1.msra.mxu0 0.0
    %244 = vmatprep.subr.mxu0 0.0
    %245 = vmatpush1.msra.mxu0 0.0
    %246 = vmatprep.subr.mxu0 0.0
    %247 = vmatpush1.msra.mxu0 0.0
    %248 = vmatprep.subr.mxu0 0.0
    %249 = vmatpush1.msra.mxu0 0.0
    %250 = vmatprep.subr.mxu0 0.0
    %251 = vmatpush1.msra.mxu0 0.0
    %252 = vmatprep.subr.mxu0 0.0
    %253 = vmatpush1.msra.mxu0 0.0
    %254 = vmatprep.subr.mxu0 0.0
    %255 = vmatpush1.msra.mxu0 0.0
    %256 = vmatprep.subr.mxu0 0.0
    %257 = vmatpush1.msra.mxu0 0.0
    %258 = vmatprep.subr.mxu0 0.0
    %259 = vmatpush1.msra.mxu0 0.0
    %260 = vmatprep.mubr.f32.mxu0 0.0
    %261 = vmatmul.mubr.f32.gmra.mrb[0].mxu0 %v185
    %v262 = vpop.f32.mrb[0].mxu0
    %v263 = vadd.f32 0.0, %v262
    %v264 = vpop.f32.mrb[0].mxu0
    %265 = vmatprep.mubr.f32.mxu0 0.0
    %266 = vmatmul.mubr.f32.gmra.mrb[0].mxu0 %v188
    %v267 = vpop.f32.mrb[0].mxu0
    %v268 = vadd.f32 0.0, %v267
    %v269 = vpop.f32.mrb[0].mxu0
    %270 = vmatprep.mubr.f32.mxu0 0.0
    %271 = vmatmul.mubr.f32.gmra.mrb[0].mxu0 %v191
    %v272 = vpop.f32.mrb[0].mxu0
    %v273 = vadd.f32 0.0, %v272
    %v274 = vpop.f32.mrb[0].mxu0
    %275 = vmatprep.mubr.f32.mxu0 0.0
    %276 = vmatmul.mubr.f32.gmra.mrb[0].mxu0 %v194
    %v277 = vpop.f32.mrb[0].mxu0
    %v278 = vadd.f32 0.0, %v277
    %v279 = vpop.f32.mrb[0].mxu0
    %280 = vdwg.mxu0
    %285 = vrot.lane.b32.xlu0 %v263, 112
    %v286 = vpop.permute.xlu0 %285
    %287 = vrot.lane.b32.xlu0 %v268, 112
    %v288 = vpop.permute.xlu0 %287
    %289 = vrot.lane.b32.xlu0 %v273, 112
    %v290 = vpop.permute.xlu0 %289
    %291 = vrot.lane.b32.xlu0 %v278, 112
    %v292 = vpop.permute.xlu0 %291
    %v297 = vmax.f32 %v263, %v286
    %v298 = vmax.f32 %v268, %v288
    %v299 = vmax.f32 %v273, %v290
    %v300 = vmax.f32 %v278, %v292
    %v301 = vld [vmem:[#allocation5] sm:$0x1]
    %v302 = vld [vmem:[#allocation5 + $0x4] sm:$0x1]
    %v303 = vlaneseq
    %v304 = vshrl.u32 %v303, 7
    %v305 = vsub.s32 0, %v304
    %v306 = vrot.slane %v301, %v305
    %v307 = vmul.f32 %v297, %v306
    %v308 = vmul.f32 %v298, %v306
    %v309 = vmul.f32 %v299, %v306
    %v310 = vmul.f32 %v300, %v306
    %v311 = vlaneseq
    %v312 = vshrl.u32 %v311, 7
    %v313 = vsub.s32 0, %v312
    %v314 = vrot.slane %v302, %v313
    %v315 = vadd.f32 %v307, %v314
    %v316 = vadd.f32 %v308, %v314
    %v317 = vadd.f32 %v309, %v314
    %v318 = vadd.f32 %v310, %v314
    %v319 = vmax.f32 %v315, 0.0
    %v320 = vmax.f32 %v316, 0.0
    %v321 = vmax.f32 %v317, 0.0
    %v322 = vmax.f32 %v318, 0.0
    %323 = vst.msk [vmem:[#allocation2 + $0x8] sm:$0xff] %vm71, %v319
    %324 = vst.msk [vmem:[#allocation2 + $0x10] sm:$0xff] %vm71, %v320
    %325 = vst.msk [vmem:[#allocation2 + $0x18] sm:$0xff] %vm71, %v321
    %326 = vst.msk [vmem:[#allocation2 + $0x20] sm:$0xff] %vm71, %v322
    %v327 = vld [vmem:[#allocation2 + $0x7] sm:$0xff]
    %v328 = vld [vmem:[#allocation2 + $0xf] sm:$0xff]
    %v329 = vld [vmem:[#allocation2 + $0x17] sm:$0xff]
    %v330 = vld [vmem:[#allocation2 + $0x1f] sm:$0xff]
    %v331 = vsel %vm96, %v327, 0.0
    %v332 = vsel %vm97, %v328, 0.0
    %v333 = vsel %vm98, %v329, 0.0
    %v334 = vsel %vm99, %v330, 0.0
    %v335 = vld [vmem:[#allocation2 + $0x8] sm:$0xff]
    %v336 = vld [vmem:[#allocation2 + $0x10] sm:$0xff]
    %v337 = vld [vmem:[#allocation2 + $0x18] sm:$0xff]
    %v338 = vld [vmem:[#allocation2 + $0x20] sm:$0xff]
    %v339 = vld [vmem:[#allocation2 + $0x9] sm:$0xff]
    %v340 = vld [vmem:[#allocation2 + $0x11] sm:$0xff]
    %v341 = vld [vmem:[#allocation2 + $0x19] sm:$0xff]
    %v342 = vld [vmem:[#allocation2 + $0x21] sm:$0xff]
    %v343 = vsel %vm128, %v339, 0.0
    %v344 = vsel %vm129, %v340, 0.0
    %v345 = vsel %vm130, %v341, 0.0
    %v346 = vsel %vm131, %v342, 0.0
    %351 = vrot.lane.b32.xlu0 %v335, 16
    %v352 = vpop.permute.xlu0 %351
    %353 = vrot.lane.b32.xlu0 %v336, 16
    %v354 = vpop.permute.xlu0 %353
    %355 = vrot.lane.b32.xlu0 %v337, 16
    %v356 = vpop.permute.xlu0 %355
    %357 = vrot.lane.b32.xlu0 %v338, 16
    %v358 = vpop.permute.xlu0 %357
    %367 = vrot.lane.b32.xlu0 %v343, 32
    %v368 = vpop.permute.xlu0 %367
    %369 = vrot.lane.b32.xlu0 %v344, 32
    %v370 = vpop.permute.xlu0 %369
    %371 = vrot.lane.b32.xlu0 %v345, 32
    %v372 = vpop.permute.xlu0 %371
    %373 = vrot.lane.b32.xlu0 %v346, 32
    %v374 = vpop.permute.xlu0 %373
    %v379 = vsel %vm71, %v331, %v352
    %v380 = vsel %vm71, %v332, %v354
    %v381 = vsel %vm71, %v333, %v356
    %v382 = vsel %vm71, %v334, %v358
    %v383 = vsel %vm172, %v379, %v368
    %v384 = vsel %vm172, %v380, %v370
    %v385 = vsel %vm172, %v381, %v372
    %v386 = vsel %vm172, %v382, %v374
    %v387 = vld [vmem:[#allocation3 + $0x60] sm:$0xff]
    %v388 = vld [vmem:[#allocation3 + $0x70] sm:$0xff]
    %v389 = vld [vmem:[#allocation3 + $0x80] sm:$0xff]
    %v390 = vld [vmem:[#allocation3 + $0x90] sm:$0xff]
    %v391 = vld [vmem:[#allocation3 + $0xa0] sm:$0xff]
    %v392 = vld [vmem:[#allocation3 + $0xb0] sm:$0xff]
    %v394 = vsel %vm183, %v383, 0
    %v397 = vsel %vm183, %v384, 0
    %v400 = vsel %vm183, %v385, 0
    %v403 = vsel %vm183, %v386, 0
    %405 = vmatprep.subr.mxu0 0.0
    %406 = vmatpush1.msra.mxu0 %v387
    %407 = vmatprep.subr.mxu0 0.0
    %408 = vmatpush1.msra.mxu0 %v388
    %409 = vmatprep.subr.mxu0 0.0
    %410 = vmatpush1.msra.mxu0 %v389
    %411 = vmatprep.subr.mxu0 0.0
    %412 = vmatpush1.msra.mxu0 %v390
    %413 = vmatprep.subr.mxu0 0.0
    %414 = vmatpush1.msra.mxu0 %v391
    %415 = vmatprep.subr.mxu0 0.0
    %416 = vmatpush1.msra.mxu0 %v392
    %417 = vmatprep.subr.mxu0 0.0
    %418 = vmatpush1.msra.mxu0 0.0
    %419 = vmatprep.subr.mxu0 0.0
    %420 = vmatpush1.msra.mxu0 0.0
    %421 = vmatprep.subr.mxu0 0.0
    %422 = vmatpush1.msra.mxu0 0.0
    %423 = vmatprep.subr.mxu0 0.0
    %424 = vmatpush1.msra.mxu0 0.0
    %425 = vmatprep.subr.mxu0 0.0
    %426 = vmatpush1.msra.mxu0 0.0
    %427 = vmatprep.subr.mxu0 0.0
    %428 = vmatpush1.msra.mxu0 0.0
    %429 = vmatprep.subr.mxu0 0.0
    %430 = vmatpush1.msra.mxu0 0.0
    %431 = vmatprep.subr.mxu0 0.0
    %432 = vmatpush1.msra.mxu0 0.0
    %433 = vmatprep.subr.mxu0 0.0
    %434 = vmatpush1.msra.mxu0 0.0
    %435 = vmatprep.subr.mxu0 0.0
    %436 = vmatpush1.msra.mxu0 0.0
    %437 = vmatprep.subr.mxu0 0.0
    %438 = vmatpush1.msra.mxu0 0.0
    %439 = vmatprep.subr.mxu0 0.0
    %440 = vmatpush1.msra.mxu0 0.0
    %441 = vmatprep.subr.mxu0 0.0
    %442 = vmatpush1.msra.mxu0 0.0
    %443 = vmatprep.subr.mxu0 0.0
    %444 = vmatpush1.msra.mxu0 0.0
    %445 = vmatprep.subr.mxu0 0.0
    %446 = vmatpush1.msra.mxu0 0.0
    %447 = vmatprep.subr.mxu0 0.0
    %448 = vmatpush1.msra.mxu0 0.0
    %449 = vmatprep.subr.mxu0 0.0
    %450 = vmatpush1.msra.mxu0 0.0
    %451 = vmatprep.subr.mxu0 0.0
    %452 = vmatpush1.msra.mxu0 0.0
    %453 = vmatprep.subr.mxu0 0.0
    %454 = vmatpush1.msra.mxu0 0.0
    %455 = vmatprep.subr.mxu0 0.0
    %456 = vmatpush1.msra.mxu0 0.0
    %457 = vmatprep.subr.mxu0 0.0
    %458 = vmatpush1.msra.mxu0 0.0
    %459 = vmatprep.subr.mxu0 0.0
    %460 = vmatpush1.msra.mxu0 0.0
    %461 = vmatprep.subr.mxu0 0.0
    %462 = vmatpush1.msra.mxu0 0.0
    %463 = vmatprep.subr.mxu0 0.0
    %464 = vmatpush1.msra.mxu0 0.0
    %465 = vmatprep.subr.mxu0 0.0
    %466 = vmatpush1.msra.mxu0 0.0
    %467 = vmatprep.subr.mxu0 0.0
    %468 = vmatpush1.msra.mxu0 0.0
    %469 = vmatprep.mubr.f32.mxu0 0.0
    %470 = vmatmul.mubr.f32.gmra.mrb[0].mxu0 %v394
    %v471 = vpop.f32.mrb[0].mxu0
    %v472 = vadd.f32 0.0, %v471
    %v473 = vpop.f32.mrb[0].mxu0
    %474 = vmatprep.mubr.f32.mxu0 0.0
    %475 = vmatmul.mubr.f32.gmra.mrb[0].mxu0 %v397
    %v476 = vpop.f32.mrb[0].mxu0
    %v477 = vadd.f32 0.0, %v476
    %v478 = vpop.f32.mrb[0].mxu0
    %479 = vmatprep.mubr.f32.mxu0 0.0
    %480 = vmatmul.mubr.f32.gmra.mrb[0].mxu0 %v400
    %v481 = vpop.f32.mrb[0].mxu0
    %v482 = vadd.f32 0.0, %v481
    %v483 = vpop.f32.mrb[0].mxu0
    %484 = vmatprep.mubr.f32.mxu0 0.0
    %485 = vmatmul.mubr.f32.gmra.mrb[0].mxu0 %v403
    %v486 = vpop.f32.mrb[0].mxu0
    %v487 = vadd.f32 0.0, %v486
    %v488 = vpop.f32.mrb[0].mxu0
    %489 = vdwg.mxu0
    %494 = vrot.lane.b32.xlu0 %v472, 96
    %v495 = vpop.permute.xlu0 %494
    %496 = vrot.lane.b32.xlu0 %v477, 96
    %v497 = vpop.permute.xlu0 %496
    %498 = vrot.lane.b32.xlu0 %v482, 96
    %v499 = vpop.permute.xlu0 %498
    %500 = vrot.lane.b32.xlu0 %v487, 96
    %v501 = vpop.permute.xlu0 %500
    %v506 = vmax.f32 %v472, %v495
    %v507 = vmax.f32 %v477, %v497
    %v508 = vmax.f32 %v482, %v499
    %v509 = vmax.f32 %v487, %v501
    %v510 = vld [vmem:[#allocation5 + $0x1] sm:$0x1]
    %v511 = vld [vmem:[#allocation5 + $0x5] sm:$0x1]
    %v512 = vlaneseq
    %v513 = vshrl.u32 %v512, 7
    %v514 = vsub.s32 0, %v513
    %v515 = vrot.slane %v510, %v514
    %v516 = vmul.f32 %v506, %v515
    %v517 = vmul.f32 %v507, %v515
    %v518 = vmul.f32 %v508, %v515
    %v519 = vmul.f32 %v509, %v515
    %v520 = vlaneseq
    %v521 = vshrl.u32 %v520, 7
    %v522 = vsub.s32 0, %v521
    %v523 = vrot.slane %v511, %v522
    %v524 = vadd.f32 %v516, %v523
    %v525 = vadd.f32 %v517, %v523
    %v526 = vadd.f32 %v518, %v523
    %v527 = vadd.f32 %v519, %v523
    %v528 = vmax.f32 %v524, 0.0
    %v529 = vmax.f32 %v525, 0.0
    %v530 = vmax.f32 %v526, 0.0
    %v531 = vmax.f32 %v527, 0.0
    %532 = vst.msk [vmem:[#allocation2 + $0x8] sm:$0xff] %vm172, %v528
    %533 = vst.msk [vmem:[#allocation2 + $0x10] sm:$0xff] %vm172, %v529
    %534 = vst.msk [vmem:[#allocation2 + $0x18] sm:$0xff] %vm172, %v530
    %535 = vst.msk [vmem:[#allocation2 + $0x20] sm:$0xff] %vm172, %v531
    %v536 = vld [vmem:[#allocation2 + $0x7] sm:$0xff]
    %v537 = vld [vmem:[#allocation2 + $0xf] sm:$0xff]
    %v538 = vld [vmem:[#allocation2 + $0x17] sm:$0xff]
    %v539 = vld [vmem:[#allocation2 + $0x1f] sm:$0xff]
    %v540 = vsel %vm96, %v536, 0.0
    %v541 = vsel %vm97, %v537, 0.0
    %v542 = vsel %vm98, %v538, 0.0
    %v543 = vsel %vm99, %v539, 0.0
    %v544 = vld [vmem:[#allocation2 + $0x8] sm:$0xff]
    %v545 = vld [vmem:[#allocation2 + $0x10] sm:$0xff]
    %v546 = vld [vmem:[#allocation2 + $0x18] sm:$0xff]
    %v547 = vld [vmem:[#allocation2 + $0x20] sm:$0xff]
    %v548 = vld [vmem:[#allocation2 + $0x9] sm:$0xff]
    %v549 = vld [vmem:[#allocation2 + $0x11] sm:$0xff]
    %v550 = vld [vmem:[#allocation2 + $0x19] sm:$0xff]
    %v551 = vld [vmem:[#allocation2 + $0x21] sm:$0xff]
    %v552 = vsel %vm128, %v548, 0.0
    %v553 = vsel %vm129, %v549, 0.0
    %v554 = vsel %vm130, %v550, 0.0
    %v555 = vsel %vm131, %v551, 0.0
    %560 = vrot.lane.b32.xlu0 %v544, 32
    %v561 = vpop.permute.xlu0 %560
    %562 = vrot.lane.b32.xlu0 %v545, 32
    %v563 = vpop.permute.xlu0 %562
    %564 = vrot.lane.b32.xlu0 %v546, 32
    %v565 = vpop.permute.xlu0 %564
    %566 = vrot.lane.b32.xlu0 %v547, 32
    %v567 = vpop.permute.xlu0 %566
    %576 = vrot.lane.b32.xlu0 %v552, 64
    %v577 = vpop.permute.xlu0 %576
    %578 = vrot.lane.b32.xlu0 %v553, 64
    %v579 = vpop.permute.xlu0 %578
    %580 = vrot.lane.b32.xlu0 %v554, 64
    %v581 = vpop.permute.xlu0 %580
    %582 = vrot.lane.b32.xlu0 %v555, 64
    %v583 = vpop.permute.xlu0 %582
    %v588 = vsel %vm172, %v540, %v561
    %v589 = vsel %vm172, %v541, %v563
    %v590 = vsel %vm172, %v542, %v565
    %v591 = vsel %vm172, %v543, %v567
    %vm592 = vcmask 523264
    %v593 = vsel %vm592, %v588, %v577
    %v594 = vsel %vm592, %v589, %v579
    %v595 = vsel %vm592, %v590, %v581
    %v596 = vsel %vm592, %v591, %v583
    %v597 = vld [vmem:[#allocation3 + $0xc0] sm:$0xff]
    %v598 = vld [vmem:[#allocation3 + $0xd0] sm:$0xff]
    %v599 = vld [vmem:[#allocation3 + $0xe0] sm:$0xff]
    %v600 = vld [vmem:[#allocation3 + $0xf0] sm:$0xff]
    %v601 = vld [vmem:[#allocation3 + $0x100] sm:$0xff]
    %v602 = vld [vmem:[#allocation3 + $0x110] sm:$0xff]
    %v603 = vld [vmem:[#allocation3 + $0x120] sm:$0xff]
    %v604 = vld [vmem:[#allocation3 + $0x130] sm:$0xff]
    %v605 = vld [vmem:[#allocation3 + $0x140] sm:$0xff]
    %v606 = vld [vmem:[#allocation3 + $0x150] sm:$0xff]
    %v607 = vld [vmem:[#allocation3 + $0x160] sm:$0xff]
    %v608 = vld [vmem:[#allocation3 + $0x170] sm:$0xff]
    %vm609 = vcmask 785408
    %v611 = vsel %vm609, %v593, 0
    %v614 = vsel %vm609, %v594, 0
    %v617 = vsel %vm609, %v595, 0
    %v620 = vsel %vm609, %v596, 0
    %622 = vmatprep.subr.mxu0 0.0
    %623 = vmatpush1.msra.mxu0 %v597
    %624 = vmatprep.subr.mxu0 0.0
    %625 = vmatpush1.msra.mxu0 %v598
    %626 = vmatprep.subr.mxu0 0.0
    %627 = vmatpush1.msra.mxu0 %v599
    %628 = vmatprep.subr.mxu0 0.0
    %629 = vmatpush1.msra.mxu0 %v600
    %630 = vmatprep.subr.mxu0 0.0
    %631 = vmatpush1.msra.mxu0 %v601
    %632 = vmatprep.subr.mxu0 0.0
    %633 = vmatpush1.msra.mxu0 %v602
    %634 = vmatprep.subr.mxu0 0.0
    %635 = vmatpush1.msra.mxu0 %v603
    %636 = vmatprep.subr.mxu0 0.0
    %637 = vmatpush1.msra.mxu0 %v604
    %638 = vmatprep.subr.mxu0 0.0
    %639 = vmatpush1.msra.mxu0 %v605
    %640 = vmatprep.subr.mxu0 0.0
    %641 = vmatpush1.msra.mxu0 %v606
    %642 = vmatprep.subr.mxu0 0.0
    %643 = vmatpush1.msra.mxu0 %v607
    %644 = vmatprep.subr.mxu0 0.0
    %645 = vmatpush1.msra.mxu0 %v608
    %646 = vmatprep.subr.mxu0 0.0
    %647 = vmatpush1.msra.mxu0 0.0
    %648 = vmatprep.subr.mxu0 0.0
    %649 = vmatpush1.msra.mxu0 0.0
    %650 = vmatprep.subr.mxu0 0.0
    %651 = vmatpush1.msra.mxu0 0.0
    %652 = vmatprep.subr.mxu0 0.0
    %653 = vmatpush1.msra.mxu0 0.0
    %654 = vmatprep.subr.mxu0 0.0
    %655 = vmatpush1.msra.mxu0 0.0
    %656 = vmatprep.subr.mxu0 0.0
    %657 = vmatpush1.msra.mxu0 0.0
    %658 = vmatprep.subr.mxu0 0.0
    %659 = vmatpush1.msra.mxu0 0.0
    %660 = vmatprep.subr.mxu0 0.0
    %661 = vmatpush1.msra.mxu0 0.0
    %662 = vmatprep.subr.mxu0 0.0
    %663 = vmatpush1.msra.mxu0 0.0
    %664 = vmatprep.subr.mxu0 0.0
    %665 = vmatpush1.msra.mxu0 0.0
    %666 = vmatprep.subr.mxu0 0.0
    %667 = vmatpush1.msra.mxu0 0.0
    %668 = vmatprep.subr.mxu0 0.0
    %669 = vmatpush1.msra.mxu0 0.0
    %670 = vmatprep.subr.mxu0 0.0
    %671 = vmatpush1.msra.mxu0 0.0
    %672 = vmatprep.subr.mxu0 0.0
    %673 = vmatpush1.msra.mxu0 0.0
    %674 = vmatprep.subr.mxu0 0.0
    %675 = vmatpush1.msra.mxu0 0.0
    %676 = vmatprep.subr.mxu0 0.0
    %677 = vmatpush1.msra.mxu0 0.0
    %678 = vmatprep.subr.mxu0 0.0
    %679 = vmatpush1.msra.mxu0 0.0
    %680 = vmatprep.subr.mxu0 0.0
    %681 = vmatpush1.msra.mxu0 0.0
    %682 = vmatprep.subr.mxu0 0.0
    %683 = vmatpush1.msra.mxu0 0.0
    %684 = vmatprep.subr.mxu0 0.0
    %685 = vmatpush1.msra.mxu0 0.0
    %686 = vmatprep.mubr.f32.mxu0 0.0
    %687 = vmatmul.mubr.f32.gmra.mrb[0].mxu0 %v611
    %v688 = vpop.f32.mrb[0].mxu0
    %v689 = vadd.f32 0.0, %v688
    %v690 = vpop.f32.mrb[0].mxu0
    %691 = vmatprep.mubr.f32.mxu0 0.0
    %692 = vmatmul.mubr.f32.gmra.mrb[0].mxu0 %v614
    %v693 = vpop.f32.mrb[0].mxu0
    %v694 = vadd.f32 0.0, %v693
    %v695 = vpop.f32.mrb[0].mxu0
    %696 = vmatprep.mubr.f32.mxu0 0.0
    %697 = vmatmul.mubr.f32.gmra.mrb[0].mxu0 %v617
    %v698 = vpop.f32.mrb[0].mxu0
    %v699 = vadd.f32 0.0, %v698
    %v700 = vpop.f32.mrb[0].mxu0
    %701 = vmatprep.mubr.f32.mxu0 0.0
    %702 = vmatmul.mubr.f32.gmra.mrb[0].mxu0 %v620
    %v703 = vpop.f32.mrb[0].mxu0
    %v704 = vadd.f32 0.0, %v703
    %v705 = vpop.f32.mrb[0].mxu0
    %706 = vdwg.mxu0
    %711 = vrot.lane.b32.xlu0 %v689, 64
    %v712 = vpop.permute.xlu0 %711
    %713 = vrot.lane.b32.xlu0 %v694, 64
    %v714 = vpop.permute.xlu0 %713
    %715 = vrot.lane.b32.xlu0 %v699, 64
    %v716 = vpop.permute.xlu0 %715
    %717 = vrot.lane.b32.xlu0 %v704, 64
    %v718 = vpop.permute.xlu0 %717
    %v723 = vmax.f32 %v689, %v712
    %v724 = vmax.f32 %v694, %v714
    %v725 = vmax.f32 %v699, %v716
    %v726 = vmax.f32 %v704, %v718
    %v727 = vld [vmem:[#allocation5 + $0x2] sm:$0x1]
    %v728 = vld [vmem:[#allocation5 + $0x6] sm:$0x1]
    %v729 = vlaneseq
    %v730 = vshrl.u32 %v729, 7
    %v731 = vsub.s32 0, %v730
    %v732 = vrot.slane %v727, %v731
    %v733 = vmul.f32 %v723, %v732
    %v734 = vmul.f32 %v724, %v732
    %v735 = vmul.f32 %v725, %v732
    %v736 = vmul.f32 %v726, %v732
    %v737 = vlaneseq
    %v738 = vshrl.u32 %v737, 7
    %v739 = vsub.s32 0, %v738
    %v740 = vrot.slane %v728, %v739
    %v741 = vadd.f32 %v733, %v740
    %v742 = vadd.f32 %v734, %v740
    %v743 = vadd.f32 %v735, %v740
    %v744 = vadd.f32 %v736, %v740
    %v745 = vmax.f32 %v741, 0.0
    %v746 = vmax.f32 %v742, 0.0
    %v747 = vmax.f32 %v743, 0.0
    %v748 = vmax.f32 %v744, 0.0
    %749 = vst.msk [vmem:[#allocation2 + $0x8] sm:$0xff] %vm592, %v745
    %750 = vst.msk [vmem:[#allocation2 + $0x10] sm:$0xff] %vm592, %v746
    %751 = vst.msk [vmem:[#allocation2 + $0x18] sm:$0xff] %vm592, %v747
    %752 = vst.msk [vmem:[#allocation2 + $0x20] sm:$0xff] %vm592, %v748
    %v753 = vld [vmem:[#allocation2 + $0x7] sm:$0xff]
    %v754 = vld [vmem:[#allocation2 + $0xf] sm:$0xff]
    %v755 = vld [vmem:[#allocation2 + $0x17] sm:$0xff]
    %v756 = vld [vmem:[#allocation2 + $0x1f] sm:$0xff]
    %v757 = vsel %vm96, %v753, 0.0
    %v758 = vsel %vm97, %v754, 0.0
    %v759 = vsel %vm98, %v755, 0.0
    %v760 = vsel %vm99, %v756, 0.0
    %v761 = vld [vmem:[#allocation2 + $0x8] sm:$0xff]
    %v762 = vld [vmem:[#allocation2 + $0x10] sm:$0xff]
    %v763 = vld [vmem:[#allocation2 + $0x18] sm:$0xff]
    %v764 = vld [vmem:[#allocation2 + $0x20] sm:$0xff]
    %v765 = vld [vmem:[#allocation2 + $0x9] sm:$0xff]
    %v766 = vld [vmem:[#allocation2 + $0x11] sm:$0xff]
    %v767 = vld [vmem:[#allocation2 + $0x19] sm:$0xff]
    %v768 = vld [vmem:[#allocation2 + $0x21] sm:$0xff]
    %v769 = vsel %vm128, %v765, 0.0
    %v770 = vsel %vm129, %v766, 0.0
    %v771 = vsel %vm130, %v767, 0.0
    %v772 = vsel %vm131, %v768, 0.0
    %777 = vrot.lane.b32.xlu0 %v761, 64
    %v778 = vpop.permute.xlu0 %777
    %779 = vrot.lane.b32.xlu0 %v762, 64
    %v780 = vpop.permute.xlu0 %779
    %781 = vrot.lane.b32.xlu0 %v763, 64
    %v782 = vpop.permute.xlu0 %781
    %783 = vrot.lane.b32.xlu0 %v764, 64
    %v784 = vpop.permute.xlu0 %783
    %v789 = vsel %vm592, %v757, %v778
    %v790 = vsel %vm592, %v758, %v780
    %v791 = vsel %vm592, %v759, %v782
    %v792 = vsel %vm592, %v760, %v784
    %v793 = vld [vmem:[#allocation3 + $0x180] sm:$0xff]
    %v794 = vld [vmem:[#allocation3 + $0x188] sm:$0xff]
    %v795 = vld [vmem:[#allocation3 + $0x190] sm:$0xff]
    %v796 = vld [vmem:[#allocation3 + $0x198] sm:$0xff]
    %v797 = vld [vmem:[#allocation3 + $0x1a0] sm:$0xff]
    %v798 = vld [vmem:[#allocation3 + $0x1a8] sm:$0xff]
    %v799 = vld [vmem:[#allocation3 + $0x1b0] sm:$0xff]
    %v800 = vld [vmem:[#allocation3 + $0x1b8] sm:$0xff]
    %v801 = vld [vmem:[#allocation3 + $0x1c0] sm:$0xff]
    %v802 = vld [vmem:[#allocation3 + $0x1c8] sm:$0xff]
    %v803 = vld [vmem:[#allocation3 + $0x1d0] sm:$0xff]
    %v804 = vld [vmem:[#allocation3 + $0x1d8] sm:$0xff]
    %v805 = vld [vmem:[#allocation3 + $0x1e0] sm:$0xff]
    %v806 = vld [vmem:[#allocation3 + $0x1e8] sm:$0xff]
    %v807 = vld [vmem:[#allocation3 + $0x1f0] sm:$0xff]
    %v808 = vld [vmem:[#allocation3 + $0x1f8] sm:$0xff]
    %v809 = vld [vmem:[#allocation3 + $0x200] sm:$0xff]
    %v810 = vld [vmem:[#allocation3 + $0x208] sm:$0xff]
    %v811 = vld [vmem:[#allocation3 + $0x210] sm:$0xff]
    %v812 = vld [vmem:[#allocation3 + $0x218] sm:$0xff]
    %v813 = vld [vmem:[#allocation3 + $0x220] sm:$0xff]
    %v814 = vld [vmem:[#allocation3 + $0x228] sm:$0xff]
    %v815 = vld [vmem:[#allocation3 + $0x230] sm:$0xff]
    %v816 = vld [vmem:[#allocation3 + $0x238] sm:$0xff]
    %v817 = vld [vmem:[#allocation3 + $0x240] sm:$0xff]
    %v818 = vld [vmem:[#allocation3 + $0x248] sm:$0xff]
    %v819 = vld [vmem:[#allocation3 + $0x250] sm:$0xff]
    %v820 = vld [vmem:[#allocation3 + $0x258] sm:$0xff]
    %v821 = vld [vmem:[#allocation3 + $0x260] sm:$0xff]
    %v822 = vld [vmem:[#allocation3 + $0x268] sm:$0xff]
    %v823 = vld [vmem:[#allocation3 + $0x270] sm:$0xff]
    %v824 = vld [vmem:[#allocation3 + $0x278] sm:$0xff]
    %v825 = vld [vmem:[#allocation3 + $0x280] sm:$0xff]
    %v826 = vld [vmem:[#allocation3 + $0x288] sm:$0xff]
    %v827 = vld [vmem:[#allocation3 + $0x290] sm:$0xff]
    %v828 = vld [vmem:[#allocation3 + $0x298] sm:$0xff]
    %v829 = vld [vmem:[#allocation3 + $0x2a0] sm:$0xff]
    %v830 = vld [vmem:[#allocation3 + $0x2a8] sm:$0xff]
    %v831 = vld [vmem:[#allocation3 + $0x2b0] sm:$0xff]
    %v832 = vld [vmem:[#allocation3 + $0x2b8] sm:$0xff]
    %v833 = vld [vmem:[#allocation3 + $0x2c0] sm:$0xff]
    %v834 = vld [vmem:[#allocation3 + $0x2c8] sm:$0xff]
    %v835 = vld [vmem:[#allocation3 + $0x2d0] sm:$0xff]
    %v836 = vld [vmem:[#allocation3 + $0x2d8] sm:$0xff]
    %v837 = vld [vmem:[#allocation3 + $0x2e0] sm:$0xff]
    %v838 = vld [vmem:[#allocation3 + $0x2e8] sm:$0xff]
    %v839 = vld [vmem:[#allocation3 + $0x2f0] sm:$0xff]
    %v840 = vld [vmem:[#allocation3 + $0x2f8] sm:$0xff]
    %v842 = vsel %vm592, %v769, 0
    %v845 = vsel %vm592, %v770, 0
    %v848 = vsel %vm592, %v771, 0
    %v851 = vsel %vm592, %v772, 0
    %853 = vmatprep.subr.mxu0 %v794
    %854 = vmatpush1.msra.mxu0 %v793
    %855 = vmatprep.subr.mxu0 %v796
    %856 = vmatpush1.msra.mxu0 %v795
    %857 = vmatprep.subr.mxu0 %v798
    %858 = vmatpush1.msra.mxu0 %v797
    %859 = vmatprep.subr.mxu0 %v800
    %860 = vmatpush1.msra.mxu0 %v799
    %861 = vmatprep.subr.mxu0 %v802
    %862 = vmatpush1.msra.mxu0 %v801
    %863 = vmatprep.subr.mxu0 %v804
    %864 = vmatpush1.msra.mxu0 %v803
    %865 = vmatprep.subr.mxu0 %v806
    %866 = vmatpush1.msra.mxu0 %v805
    %867 = vmatprep.subr.mxu0 %v808
    %868 = vmatpush1.msra.mxu0 %v807
    %869 = vmatprep.subr.mxu0 %v810
    %870 = vmatpush1.msra.mxu0 %v809
    %871 = vmatprep.subr.mxu0 %v812
    %872 = vmatpush1.msra.mxu0 %v811
    %873 = vmatprep.subr.mxu0 %v814
    %874 = vmatpush1.msra.mxu0 %v813
    %875 = vmatprep.subr.mxu0 %v816
    %876 = vmatpush1.msra.mxu0 %v815
    %877 = vmatprep.subr.mxu0 %v818
    %878 = vmatpush1.msra.mxu0 %v817
    %879 = vmatprep.subr.mxu0 %v820
    %880 = vmatpush1.msra.mxu0 %v819
    %881 = vmatprep.subr.mxu0 %v822
    %882 = vmatpush1.msra.mxu0 %v821
    %883 = vmatprep.subr.mxu0 %v824
    %884 = vmatpush1.msra.mxu0 %v823
    %885 = vmatprep.subr.mxu0 %v826
    %886 = vmatpush1.msra.mxu0 %v825
    %887 = vmatprep.subr.mxu0 %v828
    %888 = vmatpush1.msra.mxu0 %v827
    %889 = vmatprep.subr.mxu0 %v830
    %890 = vmatpush1.msra.mxu0 %v829
    %891 = vmatprep.subr.mxu0 %v832
    %892 = vmatpush1.msra.mxu0 %v831
    %893 = vmatprep.subr.mxu0 %v834
    %894 = vmatpush1.msra.mxu0 %v833
    %895 = vmatprep.subr.mxu0 %v836
    %896 = vmatpush1.msra.mxu0 %v835
    %897 = vmatprep.subr.mxu0 %v838
    %898 = vmatpush1.msra.mxu0 %v837
    %899 = vmatprep.subr.mxu0 %v840
    %900 = vmatpush1.msra.mxu0 %v839
    %901 = vmatprep.subr.mxu0 0.0
    %902 = vmatpush1.msra.mxu0 0.0
    %903 = vmatprep.subr.mxu0 0.0
    %904 = vmatpush1.msra.mxu0 0.0
    %905 = vmatprep.subr.mxu0 0.0
    %906 = vmatpush1.msra.mxu0 0.0
    %907 = vmatprep.subr.mxu0 0.0
    %908 = vmatpush1.msra.mxu0 0.0
    %909 = vmatprep.subr.mxu0 0.0
    %910 = vmatpush1.msra.mxu0 0.0
    %911 = vmatprep.subr.mxu0 0.0
    %912 = vmatpush1.msra.mxu0 0.0
    %913 = vmatprep.subr.mxu0 0.0
    %914 = vmatpush1.msra.mxu0 0.0
    %915 = vmatprep.subr.mxu0 0.0
    %916 = vmatpush1.msra.mxu0 0.0
    %917 = vmatprep.mubr.f32.mxu0 %v842
    %918 = vmatmul.mubr.f32.gmra.mrb[0].mxu0 %v789
    %v919 = vpop.f32.mrb[0].mxu0
    %v920 = vadd.f32 0.0, %v919
    %v921 = vpop.f32.mrb[0].mxu0
    %v922 = vadd.f32 0.0, %v921
    %923 = vmatprep.mubr.f32.mxu0 %v845
    %924 = vmatmul.mubr.f32.gmra.mrb[0].mxu0 %v790
    %v925 = vpop.f32.mrb[0].mxu0
    %v926 = vadd.f32 0.0, %v925
    %v927 = vpop.f32.mrb[0].mxu0
    %v928 = vadd.f32 0.0, %v927
    %929 = vmatprep.mubr.f32.mxu0 %v848
    %930 = vmatmul.mubr.f32.gmra.mrb[0].mxu0 %v791
    %v931 = vpop.f32.mrb[0].mxu0
    %v932 = vadd.f32 0.0, %v931
    %v933 = vpop.f32.mrb[0].mxu0
    %v934 = vadd.f32 0.0, %v933
    %935 = vmatprep.mubr.f32.mxu0 %v851
    %936 = vmatmul.mubr.f32.gmra.mrb[0].mxu0 %v792
    %v937 = vpop.f32.mrb[0].mxu0
    %v938 = vadd.f32 0.0, %v937
    %v939 = vpop.f32.mrb[0].mxu0
    %v940 = vadd.f32 0.0, %v939
    %941 = vdwg.mxu0
    %v942 = vmax.f32 %v920, %v922
    %v943 = vmax.f32 %v926, %v928
    %v944 = vmax.f32 %v932, %v934
    %v945 = vmax.f32 %v938, %v940
    %v946 = vld [vmem:[#allocation5 + $0x3] sm:$0x1]
    %v947 = vld [vmem:[#allocation5 + $0x7] sm:$0x1]
    %v948 = vlaneseq
    %v949 = vshrl.u32 %v948, 7
    %v950 = vsub.s32 0, %v949
    %v951 = vrot.slane %v946, %v950
    %v952 = vmul.f32 %v942, %v951
    %v953 = vmul.f32 %v943, %v951
    %v954 = vmul.f32 %v944, %v951
    %v955 = vmul.f32 %v945, %v951
    %v956 = vlaneseq
    %v957 = vshrl.u32 %v956, 7
    %v958 = vsub.s32 0, %v957
    %v959 = vrot.slane %v947, %v958
    %v960 = vadd.f32 %v952, %v959
    %v961 = vadd.f32 %v953, %v959
    %v962 = vadd.f32 %v954, %v959
    %v963 = vadd.f32 %v955, %v959
    %v964 = vmax.f32 %v960, 0.0
    %v965 = vmax.f32 %v961, 0.0
    %v966 = vmax.f32 %v962, 0.0
    %v967 = vmax.f32 %v963, 0.0
    %968 = vst [vmem:[#allocation2 + $0x8] sm:$0xff] %v964
    %969 = vst [vmem:[#allocation2 + $0x10] sm:$0xff] %v965
    %970 = vst [vmem:[#allocation2 + $0x18] sm:$0xff] %v966
    %971 = vst [vmem:[#allocation2 + $0x20] sm:$0xff] %v967
    %v972 = vld [vmem:[#allocation2 + $0x6] sm:$0xff]
    %v973 = vld [vmem:[#allocation2 + $0xe] sm:$0xff]
    %v974 = vld [vmem:[#allocation2 + $0x16] sm:$0xff]
    %v975 = vld [vmem:[#allocation2 + $0x1e] sm:$0xff]
    %v976 = vsel %vm51, 1, 0
    %v977 = vsel %vm52, 1, 0
    %v978 = vsel %vm53, 1, 0
    %v979 = vsel %vm54, 1, 0
    %980 = vset.pattern.permute.xlu0 0
    %981 = vperm.xlu0 %980, %v976
    %v982 = vpop.permute.xlu0 %981
    %983 = vset.pattern.permute.xlu0 0
    %984 = vperm.xlu0 %983, %v977
    %v985 = vpop.permute.xlu0 %984
    %986 = vset.pattern.permute.xlu0 0
    %987 = vperm.xlu0 %986, %v978
    %v988 = vpop.permute.xlu0 %987
    %989 = vset.pattern.permute.xlu0 0
    %990 = vperm.xlu0 %989, %v979
    %v991 = vpop.permute.xlu0 %990
    %vm992 = vcmp.eq.s32.totalorder %v982, 1
    %vm993 = vcmp.eq.s32.totalorder %v985, 1
    %vm994 = vcmp.eq.s32.totalorder %v988, 1
    %vm995 = vcmp.eq.s32.totalorder %v991, 1
    %v996 = vsel %vm992, %v972, 0.0
    %v997 = vsel %vm993, %v973, 0.0
    %v998 = vsel %vm994, %v974, 0.0
    %v999 = vsel %vm995, %v975, 0.0
    %v1000 = vld [vmem:[#allocation2 + $0x7] sm:$0xff]
    %v1001 = vld [vmem:[#allocation2 + $0xf] sm:$0xff]
    %v1002 = vld [vmem:[#allocation2 + $0x17] sm:$0xff]
    %v1003 = vld [vmem:[#allocation2 + $0x1f] sm:$0xff]
    %v1004 = vsel %vm96, %v1000, 0.0
    %v1005 = vsel %vm97, %v1001, 0.0
    %v1006 = vsel %vm98, %v1002, 0.0
    %v1007 = vsel %vm99, %v1003, 0.0
    %v1008 = vld [vmem:[#allocation2 + $0x8] sm:$0xff]
    %v1009 = vld [vmem:[#allocation2 + $0x10] sm:$0xff]
    %v1010 = vld [vmem:[#allocation2 + $0x18] sm:$0xff]
    %v1011 = vld [vmem:[#allocation2 + $0x20] sm:$0xff]
    %v1012 = vld [vmem:[#allocation2 + $0x9] sm:$0xff]
    %v1013 = vld [vmem:[#allocation2 + $0x11] sm:$0xff]
    %v1014 = vld [vmem:[#allocation2 + $0x19] sm:$0xff]
    %v1015 = vld [vmem:[#allocation2 + $0x21] sm:$0xff]
    %v1016 = vsel %vm128, %v1012, 0.0
    %v1017 = vsel %vm129, %v1013, 0.0
    %v1018 = vsel %vm130, %v1014, 0.0
    %v1019 = vsel %vm131, %v1015, 0.0
    %v1020 = vld [vmem:[#allocation2 + $0xa] sm:$0xff]
    %v1021 = vld [vmem:[#allocation2 + $0x12] sm:$0xff]
    %v1022 = vld [vmem:[#allocation2 + $0x1a] sm:$0xff]
    %v1023 = vld [vmem:[#allocation2 + $0x22] sm:$0xff]
    %v1024 = vsel %vm63, 1, 0
    %v1025 = vsel %vm64, 1, 0
    %v1026 = vsel %vm65, 1, 0
    %v1027 = vsel %vm66, 1, 0
    %1028 = vset.pattern.permute.xlu0 0
    %1029 = vperm.xlu0 %1028, %v1024
    %v1030 = vpop.permute.xlu0 %1029
    %1031 = vset.pattern.permute.xlu0 0
    %1032 = vperm.xlu0 %1031, %v1025
    %v1033 = vpop.permute.xlu0 %1032
    %1034 = vset.pattern.permute.xlu0 0
    %1035 = vperm.xlu0 %1034, %v1026
    %v1036 = vpop.permute.xlu0 %1035
    %1037 = vset.pattern.permute.xlu0 0
    %1038 = vperm.xlu0 %1037, %v1027
    %v1039 = vpop.permute.xlu0 %1038
    %vm1040 = vcmp.eq.s32.totalorder %v1030, 1
    %vm1041 = vcmp.eq.s32.totalorder %v1033, 1
    %vm1042 = vcmp.eq.s32.totalorder %v1036, 1
    %vm1043 = vcmp.eq.s32.totalorder %v1039, 1
    %v1044 = vsel %vm1040, %v1020, 0.0
    %v1045 = vsel %vm1041, %v1021, 0.0
    %v1046 = vsel %vm1042, %v1022, 0.0
    %v1047 = vsel %vm1043, %v1023, 0.0
    %v1048 = vld [vmem:[#allocation3 + $0x300] sm:$0xff]
    %v1049 = vld [vmem:[#allocation3 + $0x310] sm:$0xff]
    %v1050 = vld [vmem:[#allocation3 + $0x320] sm:$0xff]
    %v1051 = vld [vmem:[#allocation3 + $0x330] sm:$0xff]
    %v1052 = vld [vmem:[#allocation3 + $0x340] sm:$0xff]
    %v1053 = vld [vmem:[#allocation3 + $0x350] sm:$0xff]
    %v1054 = vld [vmem:[#allocation3 + $0x360] sm:$0xff]
    %v1055 = vld [vmem:[#allocation3 + $0x370] sm:$0xff]
    %v1056 = vld [vmem:[#allocation3 + $0x380] sm:$0xff]
    %v1057 = vld [vmem:[#allocation3 + $0x390] sm:$0xff]
    %v1058 = vld [vmem:[#allocation3 + $0x3a0] sm:$0xff]
    %v1059 = vld [vmem:[#allocation3 + $0x3b0] sm:$0xff]
    %v1060 = vld [vmem:[#allocation3 + $0x3c0] sm:$0xff]
    %v1061 = vld [vmem:[#allocation3 + $0x3d0] sm:$0xff]
    %v1062 = vld [vmem:[#allocation3 + $0x3e0] sm:$0xff]
    %v1063 = vld [vmem:[#allocation3 + $0x3f0] sm:$0xff]
    %v1064 = vld [vmem:[#allocation3 + $0x400] sm:$0xff]
    %v1065 = vld [vmem:[#allocation3 + $0x410] sm:$0xff]
    %v1066 = vld [vmem:[#allocation3 + $0x420] sm:$0xff]
    %v1067 = vld [vmem:[#allocation3 + $0x430] sm:$0xff]
    %v1068 = vld [vmem:[#allocation3 + $0x440] sm:$0xff]
    %v1069 = vld [vmem:[#allocation3 + $0x450] sm:$0xff]
    %v1070 = vld [vmem:[#allocation3 + $0x460] sm:$0xff]
    %v1071 = vld [vmem:[#allocation3 + $0x470] sm:$0xff]
    %v1072 = vld [vmem:[#allocation3 + $0x480] sm:$0xff]
    %v1073 = vld [vmem:[#allocation3 + $0x490] sm:$0xff]
    %v1074 = vld [vmem:[#allocation3 + $0x4a0] sm:$0xff]
    %v1075 = vld [vmem:[#allocation3 + $0x4b0] sm:$0xff]
    %v1076 = vld [vmem:[#allocation3 + $0x4c0] sm:$0xff]
    %v1077 = vld [vmem:[#allocation3 + $0x4d0] sm:$0xff]
    %v1078 = vld [vmem:[#allocation3 + $0x4e0] sm:$0xff]
    %v1079 = vld [vmem:[#allocation3 + $0x4f0] sm:$0xff]
    %v1080 = vld [vmem:[#allocation3 + $0x500] sm:$0xff]
    %v1081 = vld [vmem:[#allocation3 + $0x510] sm:$0xff]
    %v1082 = vld [vmem:[#allocation3 + $0x520] sm:$0xff]
    %v1083 = vld [vmem:[#allocation3 + $0x530] sm:$0xff]
    %v1084 = vld [vmem:[#allocation3 + $0x540] sm:$0xff]
    %v1085 = vld [vmem:[#allocation3 + $0x550] sm:$0xff]
    %v1086 = vld [vmem:[#allocation3 + $0x560] sm:$0xff]
    %v1087 = vld [vmem:[#allocation3 + $0x570] sm:$0xff]
    %v1088 = vld [vmem:[#allocation3 + $0x580] sm:$0xff]
    %v1089 = vld [vmem:[#allocation3 + $0x590] sm:$0xff]
    %v1090 = vld [vmem:[#allocation3 + $0x5a0] sm:$0xff]
    %v1091 = vld [vmem:[#allocation3 + $0x5b0] sm:$0xff]
    %v1092 = vld [vmem:[#allocation3 + $0x5c0] sm:$0xff]
    %v1093 = vld [vmem:[#allocation3 + $0x5d0] sm:$0xff]
    %v1094 = vld [vmem:[#allocation3 + $0x5e0] sm:$0xff]
    %v1095 = vld [vmem:[#allocation3 + $0x5f0] sm:$0xff]
    %v1096 = vld [vmem:[#allocation3 + $0x600] sm:$0xff]
    %v1097 = vld [vmem:[#allocation3 + $0x610] sm:$0xff]
    %v1098 = vld [vmem:[#allocation3 + $0x620] sm:$0xff]
    %v1099 = vld [vmem:[#allocation3 + $0x630] sm:$0xff]
    %v1100 = vld [vmem:[#allocation3 + $0x640] sm:$0xff]
    %v1101 = vld [vmem:[#allocation3 + $0x650] sm:$0xff]
    %v1102 = vld [vmem:[#allocation3 + $0x660] sm:$0xff]
    %v1103 = vld [vmem:[#allocation3 + $0x670] sm:$0xff]
    %v1104 = vld [vmem:[#allocation3 + $0x680] sm:$0xff]
    %v1105 = vld [vmem:[#allocation3 + $0x690] sm:$0xff]
    %v1106 = vld [vmem:[#allocation3 + $0x6a0] sm:$0xff]
    %v1107 = vld [vmem:[#allocation3 + $0x6b0] sm:$0xff]
    %v1108 = vld [vmem:[#allocation3 + $0x6c0] sm:$0xff]
    %v1109 = vld [vmem:[#allocation3 + $0x6d0] sm:$0xff]
    %v1110 = vld [vmem:[#allocation3 + $0x6e0] sm:$0xff]
    %v1111 = vld [vmem:[#allocation3 + $0x6f0] sm:$0xff]
    %v1112 = vld [vmem:[#allocation3 + $0x700] sm:$0xff]
    %v1113 = vld [vmem:[#allocation3 + $0x710] sm:$0xff]
    %v1114 = vld [vmem:[#allocation3 + $0x720] sm:$0xff]
    %v1115 = vld [vmem:[#allocation3 + $0x730] sm:$0xff]
    %v1116 = vld [vmem:[#allocation3 + $0x740] sm:$0xff]
    %v1117 = vld [vmem:[#allocation3 + $0x750] sm:$0xff]
    %v1118 = vld [vmem:[#allocation3 + $0x760] sm:$0xff]
    %v1119 = vld [vmem:[#allocation3 + $0x770] sm:$0xff]
    %v1120 = vld [vmem:[#allocation3 + $0x780] sm:$0xff]
    %v1121 = vld [vmem:[#allocation3 + $0x790] sm:$0xff]
    %v1122 = vld [vmem:[#allocation3 + $0x7a0] sm:$0xff]
    %v1123 = vld [vmem:[#allocation3 + $0x7b0] sm:$0xff]
    %v1124 = vld [vmem:[#allocation3 + $0x7c0] sm:$0xff]
    %v1125 = vld [vmem:[#allocation3 + $0x7d0] sm:$0xff]
    %v1126 = vld [vmem:[#allocation3 + $0x7e0] sm:$0xff]
    %v1127 = vld [vmem:[#allocation3 + $0x7f0] sm:$0xff]
    %v1128 = vld [vmem:[#allocation5 + $0x8] sm:$0x1]
    %v1129 = vlaneseq
    %v1130 = vshrl.u32 %v1129, 7
    %v1131 = vsub.s32 0, %v1130
    %v1132 = vrot.slane %v1128, %v1131
    %1133 = vmatprep.subr.mxu0 0.0
    %1134 = vmatpush1.msra.mxu0 %v1048
    %1135 = vmatprep.subr.mxu0 0.0
    %1136 = vmatpush1.msra.mxu0 %v1049
    %1137 = vmatprep.subr.mxu0 0.0
    %1138 = vmatpush1.msra.mxu0 %v1050
    %1139 = vmatprep.subr.mxu0 0.0
    %1140 = vmatpush1.msra.mxu0 %v1051
    %1141 = vmatprep.subr.mxu0 0.0
    %1142 = vmatpush1.msra.mxu0 %v1052
    %1143 = vmatprep.subr.mxu0 0.0
    %1144 = vmatpush1.msra.mxu0 %v1053
    %1145 = vmatprep.subr.mxu0 0.0
    %1146 = vmatpush1.msra.mxu0 %v1054
    %1147 = vmatprep.subr.mxu0 0.0
    %1148 = vmatpush1.msra.mxu0 %v1055
    %1149 = vmatprep.subr.mxu0 0.0
    %1150 = vmatpush1.msra.mxu0 %v1056
    %1151 = vmatprep.subr.mxu0 0.0
    %1152 = vmatpush1.msra.mxu0 %v1057
    %1153 = vmatprep.subr.mxu0 0.0
    %1154 = vmatpush1.msra.mxu0 %v1058
    %1155 = vmatprep.subr.mxu0 0.0
    %1156 = vmatpush1.msra.mxu0 %v1059
    %1157 = vmatprep.subr.mxu0 0.0
    %1158 = vmatpush1.msra.mxu0 %v1060
    %1159 = vmatprep.subr.mxu0 0.0
    %1160 = vmatpush1.msra.mxu0 %v1061
    %1161 = vmatprep.subr.mxu0 0.0
    %1162 = vmatpush1.msra.mxu0 %v1062
    %1163 = vmatprep.subr.mxu0 0.0
    %1164 = vmatpush1.msra.mxu0 %v1063
    %1165 = vmatprep.subr.mxu0 0.0
    %1166 = vmatpush1.msra.mxu0 %v1064
    %1167 = vmatprep.subr.mxu0 0.0
    %1168 = vmatpush1.msra.mxu0 %v1065
    %1169 = vmatprep.subr.mxu0 0.0
    %1170 = vmatpush1.msra.mxu0 %v1066
    %1171 = vmatprep.subr.mxu0 0.0
    %1172 = vmatpush1.msra.mxu0 %v1067
    %1173 = vmatprep.subr.mxu0 0.0
    %1174 = vmatpush1.msra.mxu0 %v1068
    %1175 = vmatprep.subr.mxu0 0.0
    %1176 = vmatpush1.msra.mxu0 %v1069
    %1177 = vmatprep.subr.mxu0 0.0
    %1178 = vmatpush1.msra.mxu0 %v1070
    %1179 = vmatprep.subr.mxu0 0.0
    %1180 = vmatpush1.msra.mxu0 %v1071
    %1181 = vmatprep.subr.mxu0 0.0
    %1182 = vmatpush1.msra.mxu0 %v1072
    %1183 = vmatprep.subr.mxu0 0.0
    %1184 = vmatpush1.msra.mxu0 %v1073
    %1185 = vmatprep.subr.mxu0 0.0
    %1186 = vmatpush1.msra.mxu0 %v1074
    %1187 = vmatprep.subr.mxu0 0.0
    %1188 = vmatpush1.msra.mxu0 %v1075
    %1189 = vmatprep.subr.mxu0 0.0
    %1190 = vmatpush1.msra.mxu0 %v1076
    %1191 = vmatprep.subr.mxu0 0.0
    %1192 = vmatpush1.msra.mxu0 %v1077
    %1193 = vmatprep.subr.mxu0 0.0
    %1194 = vmatpush1.msra.mxu0 %v1078
    %1195 = vmatprep.subr.mxu0 0.0
    %1196 = vmatpush1.msra.mxu0 %v1079
    %1197 = vmatprep.mubr.f32.mxu0 %v1004
    %1198 = vmatmul.mubr.f32.gmra.mrb[0].mxu0 %v996
    %v1199 = vpop.f32.mrb[0].mxu0
    %v1200 = vadd.f32 %v1132, %v1199
    %v1201 = vpop.f32.mrb[0].mxu0
    %1202 = vmatprep.mubr.f32.mxu0 %v1005
    %1203 = vmatmul.mubr.f32.gmra.mrb[0].mxu0 %v997
    %v1204 = vpop.f32.mrb[0].mxu0
    %v1205 = vadd.f32 %v1132, %v1204
    %v1206 = vpop.f32.mrb[0].mxu0
    %1207 = vmatprep.mubr.f32.mxu0 %v1006
    %1208 = vmatmul.mubr.f32.gmra.mrb[0].mxu0 %v998
    %v1209 = vpop.f32.mrb[0].mxu0
    %v1210 = vadd.f32 %v1132, %v1209
    %v1211 = vpop.f32.mrb[0].mxu0
    %1212 = vmatprep.mubr.f32.mxu0 %v1007
    %1213 = vmatmul.mubr.f32.gmra.mrb[0].mxu0 %v999
    %v1214 = vpop.f32.mrb[0].mxu0
    %v1215 = vadd.f32 %v1132, %v1214
    %v1216 = vpop.f32.mrb[0].mxu0
    %1217 = vdwg.mxu0
    %1218 = vmatprep.subr.mxu0 0.0
    %1219 = vmatpush1.msra.mxu0 %v1080
    %1220 = vmatprep.subr.mxu0 0.0
    %1221 = vmatpush1.msra.mxu0 %v1081
    %1222 = vmatprep.subr.mxu0 0.0
    %1223 = vmatpush1.msra.mxu0 %v1082
    %1224 = vmatprep.subr.mxu0 0.0
    %1225 = vmatpush1.msra.mxu0 %v1083
    %1226 = vmatprep.subr.mxu0 0.0
    %1227 = vmatpush1.msra.mxu0 %v1084
    %1228 = vmatprep.subr.mxu0 0.0
    %1229 = vmatpush1.msra.mxu0 %v1085
    %1230 = vmatprep.subr.mxu0 0.0
    %1231 = vmatpush1.msra.mxu0 %v1086
    %1232 = vmatprep.subr.mxu0 0.0
    %1233 = vmatpush1.msra.mxu0 %v1087
    %1234 = vmatprep.subr.mxu0 0.0
    %1235 = vmatpush1.msra.mxu0 %v1088
    %1236 = vmatprep.subr.mxu0 0.0
    %1237 = vmatpush1.msra.mxu0 %v1089
    %1238 = vmatprep.subr.mxu0 0.0
    %1239 = vmatpush1.msra.mxu0 %v1090
    %1240 = vmatprep.subr.mxu0 0.0
    %1241 = vmatpush1.msra.mxu0 %v1091
    %1242 = vmatprep.subr.mxu0 0.0
    %1243 = vmatpush1.msra.mxu0 %v1092
    %1244 = vmatprep.subr.mxu0 0.0
    %1245 = vmatpush1.msra.mxu0 %v1093
    %1246 = vmatprep.subr.mxu0 0.0
    %1247 = vmatpush1.msra.mxu0 %v1094
    %1248 = vmatprep.subr.mxu0 0.0
    %1249 = vmatpush1.msra.mxu0 %v1095
    %1250 = vmatprep.subr.mxu0 0.0
    %1251 = vmatpush1.msra.mxu0 %v1096
    %1252 = vmatprep.subr.mxu0 0.0
    %1253 = vmatpush1.msra.mxu0 %v1097
    %1254 = vmatprep.subr.mxu0 0.0
    %1255 = vmatpush1.msra.mxu0 %v1098
    %1256 = vmatprep.subr.mxu0 0.0
    %1257 = vmatpush1.msra.mxu0 %v1099
    %1258 = vmatprep.subr.mxu0 0.0
    %1259 = vmatpush1.msra.mxu0 %v1100
    %1260 = vmatprep.subr.mxu0 0.0
    %1261 = vmatpush1.msra.mxu0 %v1101
    %1262 = vmatprep.subr.mxu0 0.0
    %1263 = vmatpush1.msra.mxu0 %v1102
    %1264 = vmatprep.subr.mxu0 0.0
    %1265 = vmatpush1.msra.mxu0 %v1103
    %1266 = vmatprep.subr.mxu0 0.0
    %1267 = vmatpush1.msra.mxu0 %v1104
    %1268 = vmatprep.subr.mxu0 0.0
    %1269 = vmatpush1.msra.mxu0 %v1105
    %1270 = vmatprep.subr.mxu0 0.0
    %1271 = vmatpush1.msra.mxu0 %v1106
    %1272 = vmatprep.subr.mxu0 0.0
    %1273 = vmatpush1.msra.mxu0 %v1107
    %1274 = vmatprep.subr.mxu0 0.0
    %1275 = vmatpush1.msra.mxu0 %v1108
    %1276 = vmatprep.subr.mxu0 0.0
    %1277 = vmatpush1.msra.mxu0 %v1109
    %1278 = vmatprep.subr.mxu0 0.0
    %1279 = vmatpush1.msra.mxu0 %v1110
    %1280 = vmatprep.subr.mxu0 0.0
    %1281 = vmatpush1.msra.mxu0 %v1111
    %1282 = vmatprep.mubr.f32.mxu0 %v1016
    %1283 = vmatmul.mubr.f32.gmra.mrb[0].mxu0 %v1008
    %v1284 = vpop.f32.mrb[0].mxu0
    %v1285 = vadd.f32 %v1200, %v1284
    %v1286 = vpop.f32.mrb[0].mxu0
    %1287 = vmatprep.mubr.f32.mxu0 %v1017
    %1288 = vmatmul.mubr.f32.gmra.mrb[0].mxu0 %v1009
    %v1289 = vpop.f32.mrb[0].mxu0
    %v1290 = vadd.f32 %v1205, %v1289
    %v1291 = vpop.f32.mrb[0].mxu0
    %1292 = vmatprep.mubr.f32.mxu0 %v1018
    %1293 = vmatmul.mubr.f32.gmra.mrb[0].mxu0 %v1010
    %v1294 = vpop.f32.mrb[0].mxu0
    %v1295 = vadd.f32 %v1210, %v1294
    %v1296 = vpop.f32.mrb[0].mxu0
    %1297 = vmatprep.mubr.f32.mxu0 %v1019
    %1298 = vmatmul.mubr.f32.gmra.mrb[0].mxu0 %v1011
    %v1299 = vpop.f32.mrb[0].mxu0
    %v1300 = vadd.f32 %v1215, %v1299
    %v1301 = vpop.f32.mrb[0].mxu0
    %1302 = vdwg.mxu0
    %1303 = vmatprep.subr.mxu0 0.0
    %1304 = vmatpush1.msra.mxu0 %v1112
    %1305 = vmatprep.subr.mxu0 0.0
    %1306 = vmatpush1.msra.mxu0 %v1113
    %1307 = vmatprep.subr.mxu0 0.0
    %1308 = vmatpush1.msra.mxu0 %v1114
    %1309 = vmatprep.subr.mxu0 0.0
    %1310 = vmatpush1.msra.mxu0 %v1115
    %1311 = vmatprep.subr.mxu0 0.0
    %1312 = vmatpush1.msra.mxu0 %v1116
    %1313 = vmatprep.subr.mxu0 0.0
    %1314 = vmatpush1.msra.mxu0 %v1117
    %1315 = vmatprep.subr.mxu0 0.0
    %1316 = vmatpush1.msra.mxu0 %v1118
    %1317 = vmatprep.subr.mxu0 0.0
    %1318 = vmatpush1.msra.mxu0 %v1119
    %1319 = vmatprep.subr.mxu0 0.0
    %1320 = vmatpush1.msra.mxu0 %v1120
    %1321 = vmatprep.subr.mxu0 0.0
    %1322 = vmatpush1.msra.mxu0 %v1121
    %1323 = vmatprep.subr.mxu0 0.0
    %1324 = vmatpush1.msra.mxu0 %v1122
    %1325 = vmatprep.subr.mxu0 0.0
    %1326 = vmatpush1.msra.mxu0 %v1123
    %1327 = vmatprep.subr.mxu0 0.0
    %1328 = vmatpush1.msra.mxu0 %v1124
    %1329 = vmatprep.subr.mxu0 0.0
    %1330 = vmatpush1.msra.mxu0 %v1125
    %1331 = vmatprep.subr.mxu0 0.0
    %1332 = vmatpush1.msra.mxu0 %v1126
    %1333 = vmatprep.subr.mxu0 0.0
    %1334 = vmatpush1.msra.mxu0 %v1127
    %1335 = vmatprep.subr.mxu0 0.0
    %1336 = vmatpush1.msra.mxu0 0.0
    %1337 = vmatprep.subr.mxu0 0.0
    %1338 = vmatpush1.msra.mxu0 0.0
    %1339 = vmatprep.subr.mxu0 0.0
    %1340 = vmatpush1.msra.mxu0 0.0
    %1341 = vmatprep.subr.mxu0 0.0
    %1342 = vmatpush1.msra.mxu0 0.0
    %1343 = vmatprep.subr.mxu0 0.0
    %1344 = vmatpush1.msra.mxu0 0.0
    %1345 = vmatprep.subr.mxu0 0.0
    %1346 = vmatpush1.msra.mxu0 0.0
    %1347 = vmatprep.subr.mxu0 0.0
    %1348 = vmatpush1.msra.mxu0 0.0
    %1349 = vmatprep.subr.mxu0 0.0
    %1350 = vmatpush1.msra.mxu0 0.0
    %1351 = vmatprep.subr.mxu0 0.0
    %1352 = vmatpush1.msra.mxu0 0.0
    %1353 = vmatprep.subr.mxu0 0.0
    %1354 = vmatpush1.msra.mxu0 0.0
    %1355 = vmatprep.subr.mxu0 0.0
    %1356 = vmatpush1.msra.mxu0 0.0
    %1357 = vmatprep.subr.mxu0 0.0
    %1358 = vmatpush1.msra.mxu0 0.0
    %1359 = vmatprep.subr.mxu0 0.0
    %1360 = vmatpush1.msra.mxu0 0.0
    %1361 = vmatprep.subr.mxu0 0.0
    %1362 = vmatpush1.msra.mxu0 0.0
    %1363 = vmatprep.subr.mxu0 0.0
    %1364 = vmatpush1.msra.mxu0 0.0
    %1365 = vmatprep.subr.mxu0 0.0
    %1366 = vmatpush1.msra.mxu0 0.0
    %1367 = vmatprep.mubr.f32.mxu0 0.0
    %1368 = vmatmul.mubr.f32.gmra.mrb[0].mxu0 %v1044
    %v1369 = vpop.f32.mrb[0].mxu0
    %v1370 = vadd.f32 %v1285, %v1369
    %v1371 = vpop.f32.mrb[0].mxu0
    %1372 = vmatprep.mubr.f32.mxu0 0.0
    %1373 = vmatmul.mubr.f32.gmra.mrb[0].mxu0 %v1045
    %v1374 = vpop.f32.mrb[0].mxu0
    %v1375 = vadd.f32 %v1290, %v1374
    %v1376 = vpop.f32.mrb[0].mxu0
    %1377 = vmatprep.mubr.f32.mxu0 0.0
    %1378 = vmatmul.mubr.f32.gmra.mrb[0].mxu0 %v1046
    %v1379 = vpop.f32.mrb[0].mxu0
    %v1380 = vadd.f32 %v1295, %v1379
    %v1381 = vpop.f32.mrb[0].mxu0
    %1382 = vmatprep.mubr.f32.mxu0 0.0
    %1383 = vmatmul.mubr.f32.gmra.mrb[0].mxu0 %v1047
    %v1384 = vpop.f32.mrb[0].mxu0
    %v1385 = vadd.f32 %v1300, %v1384
    %v1386 = vpop.f32.mrb[0].mxu0
    %1387 = vdwg.mxu0
    %v1388 = vmax.f32 %v1370, 0.0
    %v1389 = vmax.f32 %v1375, 0.0
    %v1390 = vmax.f32 %v1380, 0.0
    %v1391 = vmax.f32 %v1385, 0.0
    %1392 = vst.msk [vmem:[#allocation2 + $0x8] sm:$0xff] %vm172, %v1388
    %1393 = vst.msk [vmem:[#allocation2 + $0x10] sm:$0xff] %vm172, %v1389
    %1394 = vst.msk [vmem:[#allocation2 + $0x18] sm:$0xff] %vm172, %v1390
    %1395 = vst.msk [vmem:[#allocation2 + $0x20] sm:$0xff] %vm172, %v1391
    %v1396 = vld [vmem:[#allocation2 + $0x7] sm:$0xff]
    %v1397 = vld [vmem:[#allocation2 + $0xf] sm:$0xff]
    %v1398 = vld [vmem:[#allocation2 + $0x17] sm:$0xff]
    %v1399 = vld [vmem:[#allocation2 + $0x1f] sm:$0xff]
    %v1400 = vsel %vm96, %v1396, 0.0
    %v1401 = vsel %vm97, %v1397, 0.0
    %v1402 = vsel %vm98, %v1398, 0.0
    %v1403 = vsel %vm99, %v1399, 0.0
    %v1404 = vld [vmem:[#allocation2 + $0x8] sm:$0xff]
    %v1405 = vld [vmem:[#allocation2 + $0x10] sm:$0xff]
    %v1406 = vld [vmem:[#allocation2 + $0x18] sm:$0xff]
    %v1407 = vld [vmem:[#allocation2 + $0x20] sm:$0xff]
    %v1408 = vld [vmem:[#allocation2 + $0x9] sm:$0xff]
    %v1409 = vld [vmem:[#allocation2 + $0x11] sm:$0xff]
    %v1410 = vld [vmem:[#allocation2 + $0x19] sm:$0xff]
    %v1411 = vld [vmem:[#allocation2 + $0x21] sm:$0xff]
    %v1412 = vsel %vm128, %v1408, 0.0
    %v1413 = vsel %vm129, %v1409, 0.0
    %v1414 = vsel %vm130, %v1410, 0.0
    %v1415 = vsel %vm131, %v1411, 0.0
    %1420 = vrot.lane.b32.xlu0 %v1404, 32
    %v1421 = vpop.permute.xlu0 %1420
    %1422 = vrot.lane.b32.xlu0 %v1405, 32
    %v1423 = vpop.permute.xlu0 %1422
    %1424 = vrot.lane.b32.xlu0 %v1406, 32
    %v1425 = vpop.permute.xlu0 %1424
    %1426 = vrot.lane.b32.xlu0 %v1407, 32
    %v1427 = vpop.permute.xlu0 %1426
    %1436 = vrot.lane.b32.xlu0 %v1412, 64
    %v1437 = vpop.permute.xlu0 %1436
    %1438 = vrot.lane.b32.xlu0 %v1413, 64
    %v1439 = vpop.permute.xlu0 %1438
    %1440 = vrot.lane.b32.xlu0 %v1414, 64
    %v1441 = vpop.permute.xlu0 %1440
    %1442 = vrot.lane.b32.xlu0 %v1415, 64
    %v1443 = vpop.permute.xlu0 %1442
    %v1448 = vsel %vm172, %v1400, %v1421
    %v1449 = vsel %vm172, %v1401, %v1423
    %v1450 = vsel %vm172, %v1402, %v1425
    %v1451 = vsel %vm172, %v1403, %v1427
    %v1452 = vsel %vm592, %v1448, %v1437
    %v1453 = vsel %vm592, %v1449, %v1439
    %v1454 = vsel %vm592, %v1450, %v1441
    %v1455 = vsel %vm592, %v1451, %v1443
    %v1456 = vld [vmem:[#allocation3 + $0x800] sm:$0xff]
    %v1457 = vld [vmem:[#allocation3 + $0x810] sm:$0xff]
    %v1458 = vld [vmem:[#allocation3 + $0x820] sm:$0xff]
    %v1459 = vld [vmem:[#allocation3 + $0x830] sm:$0xff]
    %v1460 = vld [vmem:[#allocation3 + $0x840] sm:$0xff]
    %v1461 = vld [vmem:[#allocation3 + $0x850] sm:$0xff]
    %v1462 = vld [vmem:[#allocation3 + $0x860] sm:$0xff]
    %v1463 = vld [vmem:[#allocation3 + $0x870] sm:$0xff]
    %v1464 = vld [vmem:[#allocation3 + $0x880] sm:$0xff]
    %v1465 = vld [vmem:[#allocation3 + $0x890] sm:$0xff]
    %v1466 = vld [vmem:[#allocation3 + $0x8a0] sm:$0xff]
    %v1467 = vld [vmem:[#allocation3 + $0x8b0] sm:$0xff]
    %v1468 = vld [vmem:[#allocation5 + $0x9] sm:$0x1]
    %v1469 = vlaneseq
    %v1470 = vshrl.u32 %v1469, 7
    %v1471 = vsub.s32 0, %v1470
    %v1472 = vrot.slane %v1468, %v1471
    %v1474 = vsel %vm609, %v1452, 0
    %v1477 = vsel %vm609, %v1453, 0
    %v1480 = vsel %vm609, %v1454, 0
    %v1483 = vsel %vm609, %v1455, 0
    %1485 = vmatprep.subr.mxu0 0.0
    %1486 = vmatpush1.msra.mxu0 %v1456
    %1487 = vmatprep.subr.mxu0 0.0
    %1488 = vmatpush1.msra.mxu0 %v1457
    %1489 = vmatprep.subr.mxu0 0.0
    %1490 = vmatpush1.msra.mxu0 %v1458
    %1491 = vmatprep.subr.mxu0 0.0
    %1492 = vmatpush1.msra.mxu0 %v1459
    %1493 = vmatprep.subr.mxu0 0.0
    %1494 = vmatpush1.msra.mxu0 %v1460
    %1495 = vmatprep.subr.mxu0 0.0
    %1496 = vmatpush1.msra.mxu0 %v1461
    %1497 = vmatprep.subr.mxu0 0.0
    %1498 = vmatpush1.msra.mxu0 %v1462
    %1499 = vmatprep.subr.mxu0 0.0
    %1500 = vmatpush1.msra.mxu0 %v1463
    %1501 = vmatprep.subr.mxu0 0.0
    %1502 = vmatpush1.msra.mxu0 %v1464
    %1503 = vmatprep.subr.mxu0 0.0
    %1504 = vmatpush1.msra.mxu0 %v1465
    %1505 = vmatprep.subr.mxu0 0.0
    %1506 = vmatpush1.msra.mxu0 %v1466
    %1507 = vmatprep.subr.mxu0 0.0
    %1508 = vmatpush1.msra.mxu0 %v1467
    %1509 = vmatprep.subr.mxu0 0.0
    %1510 = vmatpush1.msra.mxu0 0.0
    %1511 = vmatprep.subr.mxu0 0.0
    %1512 = vmatpush1.msra.mxu0 0.0
    %1513 = vmatprep.subr.mxu0 0.0
    %1514 = vmatpush1.msra.mxu0 0.0
    %1515 = vmatprep.subr.mxu0 0.0
    %1516 = vmatpush1.msra.mxu0 0.0
    %1517 = vmatprep.subr.mxu0 0.0
    %1518 = vmatpush1.msra.mxu0 0.0
    %1519 = vmatprep.subr.mxu0 0.0
    %1520 = vmatpush1.msra.mxu0 0.0
    %1521 = vmatprep.subr.mxu0 0.0
    %1522 = vmatpush1.msra.mxu0 0.0
    %1523 = vmatprep.subr.mxu0 0.0
    %1524 = vmatpush1.msra.mxu0 0.0
    %1525 = vmatprep.subr.mxu0 0.0
    %1526 = vmatpush1.msra.mxu0 0.0
    %1527 = vmatprep.subr.mxu0 0.0
    %1528 = vmatpush1.msra.mxu0 0.0
    %1529 = vmatprep.subr.mxu0 0.0
    %1530 = vmatpush1.msra.mxu0 0.0
    %1531 = vmatprep.subr.mxu0 0.0
    %1532 = vmatpush1.msra.mxu0 0.0
    %1533 = vmatprep.subr.mxu0 0.0
    %1534 = vmatpush1.msra.mxu0 0.0
    %1535 = vmatprep.subr.mxu0 0.0
    %1536 = vmatpush1.msra.mxu0 0.0
    %1537 = vmatprep.subr.mxu0 0.0
    %1538 = vmatpush1.msra.mxu0 0.0
    %1539 = vmatprep.subr.mxu0 0.0
    %1540 = vmatpush1.msra.mxu0 0.0
    %1541 = vmatprep.subr.mxu0 0.0
    %1542 = vmatpush1.msra.mxu0 0.0
    %1543 = vmatprep.subr.mxu0 0.0
    %1544 = vmatpush1.msra.mxu0 0.0
    %1545 = vmatprep.subr.mxu0 0.0
    %1546 = vmatpush1.msra.mxu0 0.0
    %1547 = vmatprep.subr.mxu0 0.0
    %1548 = vmatpush1.msra.mxu0 0.0
    %1549 = vmatprep.mubr.f32.mxu0 0.0
    %1550 = vmatmul.mubr.f32.gmra.mrb[0].mxu0 %v1474
    %v1551 = vpop.f32.mrb[0].mxu0
    %v1552 = vadd.f32 %v1472, %v1551
    %v1553 = vpop.f32.mrb[0].mxu0
    %1554 = vmatprep.mubr.f32.mxu0 0.0
    %1555 = vmatmul.mubr.f32.gmra.mrb[0].mxu0 %v1477
    %v1556 = vpop.f32.mrb[0].mxu0
    %v1557 = vadd.f32 %v1472, %v1556
    %v1558 = vpop.f32.mrb[0].mxu0
    %1559 = vmatprep.mubr.f32.mxu0 0.0
    %1560 = vmatmul.mubr.f32.gmra.mrb[0].mxu0 %v1480
    %v1561 = vpop.f32.mrb[0].mxu0
    %v1562 = vadd.f32 %v1472, %v1561
    %v1563 = vpop.f32.mrb[0].mxu0
    %1564 = vmatprep.mubr.f32.mxu0 0.0
    %1565 = vmatmul.mubr.f32.gmra.mrb[0].mxu0 %v1483
    %v1566 = vpop.f32.mrb[0].mxu0
    %v1567 = vadd.f32 %v1472, %v1566
    %v1568 = vpop.f32.mrb[0].mxu0
    %1569 = vdwg.mxu0
    %v1570 = vmax.f32 %v1552, 0.0
    %v1571 = vmax.f32 %v1557, 0.0
    %v1572 = vmax.f32 %v1562, 0.0
    %v1573 = vmax.f32 %v1567, 0.0
    %1574 = vst.msk [vmem:[#allocation2 + $0x8] sm:$0xff] %vm71, %v1570
    %1575 = vst.msk [vmem:[#allocation2 + $0x10] sm:$0xff] %vm71, %v1571
    %1576 = vst.msk [vmem:[#allocation2 + $0x18] sm:$0xff] %vm71, %v1572
    %1577 = vst.msk [vmem:[#allocation2 + $0x20] sm:$0xff] %vm71, %v1573
    %v1578 = vld [vmem:[#allocation2 + $0x7] sm:$0xff]
    %v1579 = vld [vmem:[#allocation2 + $0xf] sm:$0xff]
    %v1580 = vld [vmem:[#allocation2 + $0x17] sm:$0xff]
    %v1581 = vld [vmem:[#allocation2 + $0x1f] sm:$0xff]
    %v1582 = vsel %vm96, %v1578, 0.0
    %v1583 = vsel %vm97, %v1579, 0.0
    %v1584 = vsel %vm98, %v1580, 0.0
    %v1585 = vsel %vm99, %v1581, 0.0
    %v1586 = vld [vmem:[#allocation2 + $0x8] sm:$0xff]
    %v1587 = vld [vmem:[#allocation2 + $0x10] sm:$0xff]
    %v1588 = vld [vmem:[#allocation2 + $0x18] sm:$0xff]
    %v1589 = vld [vmem:[#allocation2 + $0x20] sm:$0xff]
    %v1590 = vld [vmem:[#allocation2 + $0x9] sm:$0xff]
    %v1591 = vld [vmem:[#allocation2 + $0x11] sm:$0xff]
    %v1592 = vld [vmem:[#allocation2 + $0x19] sm:$0xff]
    %v1593 = vld [vmem:[#allocation2 + $0x21] sm:$0xff]
    %v1594 = vsel %vm128, %v1590, 0.0
    %v1595 = vsel %vm129, %v1591, 0.0
    %v1596 = vsel %vm130, %v1592, 0.0
    %v1597 = vsel %vm131, %v1593, 0.0
    %1602 = vrot.lane.b32.xlu0 %v1586, 16
    %v1603 = vpop.permute.xlu0 %1602
    %1604 = vrot.lane.b32.xlu0 %v1587, 16
    %v1605 = vpop.permute.xlu0 %1604
    %1606 = vrot.lane.b32.xlu0 %v1588, 16
    %v1607 = vpop.permute.xlu0 %1606
    %1608 = vrot.lane.b32.xlu0 %v1589, 16
    %v1609 = vpop.permute.xlu0 %1608
    %1618 = vrot.lane.b32.xlu0 %v1594, 32
    %v1619 = vpop.permute.xlu0 %1618
    %1620 = vrot.lane.b32.xlu0 %v1595, 32
    %v1621 = vpop.permute.xlu0 %1620
    %1622 = vrot.lane.b32.xlu0 %v1596, 32
    %v1623 = vpop.permute.xlu0 %1622
    %1624 = vrot.lane.b32.xlu0 %v1597, 32
    %v1625 = vpop.permute.xlu0 %1624
    %v1630 = vsel %vm71, %v1582, %v1603
    %v1631 = vsel %vm71, %v1583, %v1605
    %v1632 = vsel %vm71, %v1584, %v1607
    %v1633 = vsel %vm71, %v1585, %v1609
    %v1634 = vsel %vm172, %v1630, %v1619
    %v1635 = vsel %vm172, %v1631, %v1621
    %v1636 = vsel %vm172, %v1632, %v1623
    %v1637 = vsel %vm172, %v1633, %v1625
    %v1638 = vld [vmem:[#allocation3 + $0x8c0] sm:$0xff]
    %v1639 = vld [vmem:[#allocation3 + $0x8d0] sm:$0xff]
    %v1640 = vld [vmem:[#allocation3 + $0x8e0] sm:$0xff]
    %v1641 = vld [vmem:[#allocation3 + $0x8f0] sm:$0xff]
    %v1642 = vld [vmem:[#allocation3 + $0x900] sm:$0xff]
    %v1643 = vld [vmem:[#allocation3 + $0x910] sm:$0xff]
    %v1644 = vld [vmem:[#allocation5 + $0xa] sm:$0x1]
    %v1645 = vlaneseq
    %v1646 = vshrl.u32 %v1645, 7
    %v1647 = vsub.s32 0, %v1646
    %v1648 = vrot.slane %v1644, %v1647
    %v1650 = vsel %vm183, %v1634, 0
    %v1653 = vsel %vm183, %v1635, 0
    %v1656 = vsel %vm183, %v1636, 0
    %v1659 = vsel %vm183, %v1637, 0
    %1661 = vmatprep.subr.mxu0 0.0
    %1662 = vmatpush1.msra.mxu0 %v1638
    %1663 = vmatprep.subr.mxu0 0.0
    %1664 = vmatpush1.msra.mxu0 %v1639
    %1665 = vmatprep.subr.mxu0 0.0
    %1666 = vmatpush1.msra.mxu0 %v1640
    %1667 = vmatprep.subr.mxu0 0.0
    %1668 = vmatpush1.msra.mxu0 %v1641
    %1669 = vmatprep.subr.mxu0 0.0
    %1670 = vmatpush1.msra.mxu0 %v1642
    %1671 = vmatprep.subr.mxu0 0.0
    %1672 = vmatpush1.msra.mxu0 %v1643
    %1673 = vmatprep.subr.mxu0 0.0
    %1674 = vmatpush1.msra.mxu0 0.0
    %1675 = vmatprep.subr.mxu0 0.0
    %1676 = vmatpush1.msra.mxu0 0.0
    %1677 = vmatprep.subr.mxu0 0.0
    %1678 = vmatpush1.msra.mxu0 0.0
    %1679 = vmatprep.subr.mxu0 0.0
    %1680 = vmatpush1.msra.mxu0 0.0
    %1681 = vmatprep.subr.mxu0 0.0
    %1682 = vmatpush1.msra.mxu0 0.0
    %1683 = vmatprep.subr.mxu0 0.0
    %1684 = vmatpush1.msra.mxu0 0.0
    %1685 = vmatprep.subr.mxu0 0.0
    %1686 = vmatpush1.msra.mxu0 0.0
    %1687 = vmatprep.subr.mxu0 0.0
    %1688 = vmatpush1.msra.mxu0 0.0
    %1689 = vmatprep.subr.mxu0 0.0
    %1690 = vmatpush1.msra.mxu0 0.0
    %1691 = vmatprep.subr.mxu0 0.0
    %1692 = vmatpush1.msra.mxu0 0.0
    %1693 = vmatprep.subr.mxu0 0.0
    %1694 = vmatpush1.msra.mxu0 0.0
    %1695 = vmatprep.subr.mxu0 0.0
    %1696 = vmatpush1.msra.mxu0 0.0
    %1697 = vmatprep.subr.mxu0 0.0
    %1698 = vmatpush1.msra.mxu0 0.0
    %1699 = vmatprep.subr.mxu0 0.0
    %1700 = vmatpush1.msra.mxu0 0.0
    %1701 = vmatprep.subr.mxu0 0.0
    %1702 = vmatpush1.msra.mxu0 0.0
    %1703 = vmatprep.subr.mxu0 0.0
    %1704 = vmatpush1.msra.mxu0 0.0
    %1705 = vmatprep.subr.mxu0 0.0
    %1706 = vmatpush1.msra.mxu0 0.0
    %1707 = vmatprep.subr.mxu0 0.0
    %1708 = vmatpush1.msra.mxu0 0.0
    %1709 = vmatprep.subr.mxu0 0.0
    %1710 = vmatpush1.msra.mxu0 0.0
    %1711 = vmatprep.subr.mxu0 0.0
    %1712 = vmatpush1.msra.mxu0 0.0
    %1713 = vmatprep.subr.mxu0 0.0
    %1714 = vmatpush1.msra.mxu0 0.0
    %1715 = vmatprep.subr.mxu0 0.0
    %1716 = vmatpush1.msra.mxu0 0.0
    %1717 = vmatprep.subr.mxu0 0.0
    %1718 = vmatpush1.msra.mxu0 0.0
    %1719 = vmatprep.subr.mxu0 0.0
    %1720 = vmatpush1.msra.mxu0 0.0
    %1721 = vmatprep.subr.mxu0 0.0
    %1722 = vmatpush1.msra.mxu0 0.0
    %1723 = vmatprep.subr.mxu0 0.0
    %1724 = vmatpush1.msra.mxu0 0.0
    %1725 = vmatprep.mubr.f32.mxu0 0.0
    %1726 = vmatmul.mubr.f32.gmra.mrb[0].mxu0 %v1650
    %v1727 = vpop.f32.mrb[0].mxu0
    %v1728 = vadd.f32 %v1648, %v1727
    %v1729 = vpop.f32.mrb[0].mxu0
    %1730 = vmatprep.mubr.f32.mxu0 0.0
    %1731 = vmatmul.mubr.f32.gmra.mrb[0].mxu0 %v1653
    %v1732 = vpop.f32.mrb[0].mxu0
    %v1733 = vadd.f32 %v1648, %v1732
    %v1734 = vpop.f32.mrb[0].mxu0
    %1735 = vmatprep.mubr.f32.mxu0 0.0
    %1736 = vmatmul.mubr.f32.gmra.mrb[0].mxu0 %v1656
    %v1737 = vpop.f32.mrb[0].mxu0
    %v1738 = vadd.f32 %v1648, %v1737
    %v1739 = vpop.f32.mrb[0].mxu0
    %1740 = vmatprep.mubr.f32.mxu0 0.0
    %1741 = vmatmul.mubr.f32.gmra.mrb[0].mxu0 %v1659
    %v1742 = vpop.f32.mrb[0].mxu0
    %v1743 = vadd.f32 %v1648, %v1742
    %v1744 = vpop.f32.mrb[0].mxu0
    %1745 = vdwg.mxu0
    %v1746 = vmax.f32 %v1728, 0.0
    %v1747 = vmax.f32 %v1733, 0.0
    %v1748 = vmax.f32 %v1738, 0.0
    %v1749 = vmax.f32 %v1743, 0.0
    %vm1750 = vcmask 64512
    %1751 = vst.msk [vmem:[#allocation2 + $0x8] sm:$0xff] %vm1750, %v1746
    %1752 = vst.msk [vmem:[#allocation2 + $0x10] sm:$0xff] %vm1750, %v1747
    %1753 = vst.msk [vmem:[#allocation2 + $0x18] sm:$0xff] %vm1750, %v1748
    %1754 = vst.msk [vmem:[#allocation2 + $0x20] sm:$0xff] %vm1750, %v1749
    %v1755 = vld [vmem:[#allocation2 + $0x7] sm:$0xff]
    %v1756 = vld [vmem:[#allocation2 + $0xf] sm:$0xff]
    %v1757 = vld [vmem:[#allocation2 + $0x17] sm:$0xff]
    %v1758 = vld [vmem:[#allocation2 + $0x1f] sm:$0xff]
    %v1759 = vsel %vm96, %v1755, 0.0
    %v1760 = vsel %vm97, %v1756, 0.0
    %v1761 = vsel %vm98, %v1757, 0.0
    %v1762 = vsel %vm99, %v1758, 0.0
    %v1763 = vld [vmem:[#allocation2 + $0x8] sm:$0xff]
    %v1764 = vld [vmem:[#allocation2 + $0x10] sm:$0xff]
    %v1765 = vld [vmem:[#allocation2 + $0x18] sm:$0xff]
    %v1766 = vld [vmem:[#allocation2 + $0x20] sm:$0xff]
    %v1767 = vld [vmem:[#allocation2 + $0x9] sm:$0xff]
    %v1768 = vld [vmem:[#allocation2 + $0x11] sm:$0xff]
    %v1769 = vld [vmem:[#allocation2 + $0x19] sm:$0xff]
    %v1770 = vld [vmem:[#allocation2 + $0x21] sm:$0xff]
    %v1771 = vsel %vm128, %v1767, 0.0
    %v1772 = vsel %vm129, %v1768, 0.0
    %v1773 = vsel %vm130, %v1769, 0.0
    %v1774 = vsel %vm131, %v1770, 0.0
    %1779 = vrot.lane.b32.xlu0 %v1763, 8
    %v1780 = vpop.permute.xlu0 %1779
    %1781 = vrot.lane.b32.xlu0 %v1764, 8
    %v1782 = vpop.permute.xlu0 %1781
    %1783 = vrot.lane.b32.xlu0 %v1765, 8
    %v1784 = vpop.permute.xlu0 %1783
    %1785 = vrot.lane.b32.xlu0 %v1766, 8
    %v1786 = vpop.permute.xlu0 %1785
    %1795 = vrot.lane.b32.xlu0 %v1771, 16
    %v1796 = vpop.permute.xlu0 %1795
    %1797 = vrot.lane.b32.xlu0 %v1772, 16
    %v1798 = vpop.permute.xlu0 %1797
    %1799 = vrot.lane.b32.xlu0 %v1773, 16
    %v1800 = vpop.permute.xlu0 %1799
    %1801 = vrot.lane.b32.xlu0 %v1774, 16
    %v1802 = vpop.permute.xlu0 %1801
    %v1807 = vsel %vm1750, %v1759, %v1780
    %v1808 = vsel %vm1750, %v1760, %v1782
    %v1809 = vsel %vm1750, %v1761, %v1784
    %v1810 = vsel %vm1750, %v1762, %v1786
    %v1811 = vsel %vm71, %v1807, %v1796
    %v1812 = vsel %vm71, %v1808, %v1798
    %v1813 = vsel %vm71, %v1809, %v1800
    %v1814 = vsel %vm71, %v1810, %v1802
    %v1815 = vld [vmem:[#allocation3 + $0x920] sm:$0xff]
    %v1816 = vld [vmem:[#allocation3 + $0x930] sm:$0xff]
    %v1817 = vld [vmem:[#allocation3 + $0x940] sm:$0xff]
    %v1818 = vld [vmem:[#allocation5 + $0xb] sm:$0x1]
    %v1819 = vlaneseq
    %v1820 = vshrl.u32 %v1819, 7
    %v1821 = vsub.s32 0, %v1820
    %v1822 = vrot.slane %v1818, %v1821
    %vm1823 = vcmask 195584
    %v1825 = vsel %vm1823, %v1811, 0
    %v1828 = vsel %vm1823, %v1812, 0
    %v1831 = vsel %vm1823, %v1813, 0
    %v1834 = vsel %vm1823, %v1814, 0
    %1836 = vmatprep.subr.mxu0 0.0
    %1837 = vmatpush1.msra.mxu0 %v1815
    %1838 = vmatprep.subr.mxu0 0.0
    %1839 = vmatpush1.msra.mxu0 %v1816
    %1840 = vmatprep.subr.mxu0 0.0
    %1841 = vmatpush1.msra.mxu0 %v1817
    %1842 = vmatprep.subr.mxu0 0.0
    %1843 = vmatpush1.msra.mxu0 0.0
    %1844 = vmatprep.subr.mxu0 0.0
    %1845 = vmatpush1.msra.mxu0 0.0
    %1846 = vmatprep.subr.mxu0 0.0
    %1847 = vmatpush1.msra.mxu0 0.0
    %1848 = vmatprep.subr.mxu0 0.0
    %1849 = vmatpush1.msra.mxu0 0.0
    %1850 = vmatprep.subr.mxu0 0.0
    %1851 = vmatpush1.msra.mxu0 0.0
    %1852 = vmatprep.subr.mxu0 0.0
    %1853 = vmatpush1.msra.mxu0 0.0
    %1854 = vmatprep.subr.mxu0 0.0
    %1855 = vmatpush1.msra.mxu0 0.0
    %1856 = vmatprep.subr.mxu0 0.0
    %1857 = vmatpush1.msra.mxu0 0.0
    %1858 = vmatprep.subr.mxu0 0.0
    %1859 = vmatpush1.msra.mxu0 0.0
    %1860 = vmatprep.subr.mxu0 0.0
    %1861 = vmatpush1.msra.mxu0 0.0
    %1862 = vmatprep.subr.mxu0 0.0
    %1863 = vmatpush1.msra.mxu0 0.0
    %1864 = vmatprep.subr.mxu0 0.0
    %1865 = vmatpush1.msra.mxu0 0.0
    %1866 = vmatprep.subr.mxu0 0.0
    %1867 = vmatpush1.msra.mxu0 0.0
    %1868 = vmatprep.subr.mxu0 0.0
    %1869 = vmatpush1.msra.mxu0 0.0
    %1870 = vmatprep.subr.mxu0 0.0
    %1871 = vmatpush1.msra.mxu0 0.0
    %1872 = vmatprep.subr.mxu0 0.0
    %1873 = vmatpush1.msra.mxu0 0.0
    %1874 = vmatprep.subr.mxu0 0.0
    %1875 = vmatpush1.msra.mxu0 0.0
    %1876 = vmatprep.subr.mxu0 0.0
    %1877 = vmatpush1.msra.mxu0 0.0
    %1878 = vmatprep.subr.mxu0 0.0
    %1879 = vmatpush1.msra.mxu0 0.0
    %1880 = vmatprep.subr.mxu0 0.0
    %1881 = vmatpush1.msra.mxu0 0.0
    %1882 = vmatprep.subr.mxu0 0.0
    %1883 = vmatpush1.msra.mxu0 0.0
    %1884 = vmatprep.subr.mxu0 0.0
    %1885 = vmatpush1.msra.mxu0 0.0
    %1886 = vmatprep.subr.mxu0 0.0
    %1887 = vmatpush1.msra.mxu0 0.0
    %1888 = vmatprep.subr.mxu0 0.0
    %1889 = vmatpush1.msra.mxu0 0.0
    %1890 = vmatprep.subr.mxu0 0.0
    %1891 = vmatpush1.msra.mxu0 0.0
    %1892 = vmatprep.subr.mxu0 0.0
    %1893 = vmatpush1.msra.mxu0 0.0
    %1894 = vmatprep.subr.mxu0 0.0
    %1895 = vmatpush1.msra.mxu0 0.0
    %1896 = vmatprep.subr.mxu0 0.0
    %1897 = vmatpush1.msra.mxu0 0.0
    %1898 = vmatprep.subr.mxu0 0.0
    %1899 = vmatpush1.msra.mxu0 0.0
    %1900 = vmatprep.mubr.f32.mxu0 0.0
    %1901 = vmatmul.mubr.f32.gmra.mrb[0].mxu0 %v1825
    %v1902 = vpop.f32.mrb[0].mxu0
    %v1903 = vadd.f32 %v1822, %v1902
    %v1904 = vpop.f32.mrb[0].mxu0
    %1905 = vmatprep.mubr.f32.mxu0 0.0
    %1906 = vmatmul.mubr.f32.gmra.mrb[0].mxu0 %v1828
    %v1907 = vpop.f32.mrb[0].mxu0
    %v1908 = vadd.f32 %v1822, %v1907
    %v1909 = vpop.f32.mrb[0].mxu0
    %1910 = vmatprep.mubr.f32.mxu0 0.0
    %1911 = vmatmul.mubr.f32.gmra.mrb[0].mxu0 %v1831
    %v1912 = vpop.f32.mrb[0].mxu0
    %v1913 = vadd.f32 %v1822, %v1912
    %v1914 = vpop.f32.mrb[0].mxu0
    %1915 = vmatprep.mubr.f32.mxu0 0.0
    %1916 = vmatmul.mubr.f32.gmra.mrb[0].mxu0 %v1834
    %v1917 = vpop.f32.mrb[0].mxu0
    %v1918 = vadd.f32 %v1822, %v1917
    %v1919 = vpop.f32.mrb[0].mxu0
    %1920 = vdwg.mxu0
    %v1921 = vmax.f32 %v1903, 0.0
    %v1922 = vmax.f32 %v1908, 0.0
    %v1923 = vmax.f32 %v1913, 0.0
    %v1924 = vmax.f32 %v1918, 0.0
    %1925 = vst.msk [vmem:[%s4] sm:$0xff] %vm71, %v1921
    %1926 = vst.msk [vmem:[%s4 + $0x8] sm:$0xff] %vm71, %v1922
    %1927 = vst.msk [vmem:[%s4 + $0x10] sm:$0xff] %vm71, %v1923
    %1928 = vst.msk [vmem:[%s4 + $0x18] sm:$0xff] %vm71, %v1924
    // Predicated region
    $region26: #{tpu_custom_call.1} parent=1 // pred_check
      _
    $region27: #{tpu_custom_call.1} parent=1 // pred_check_branch
      %1930 = sbr.rel (0) target = $region29
    $region28: #{tpu_custom_call.1} parent=1 // pred_region
      _
    $region29: #{tpu_custom_call.1} parent=1 // pred_fallthru
      _
    // Predicated region
    $region30: #{tpu_custom_call.1} parent=1 // pred_check
      _
    $region31: #{tpu_custom_call.1} parent=1 // pred_check_branch
      %1932 = sbr.rel (0) target = $region33
    $region32: #{tpu_custom_call.1} parent=1 // pred_region
      _
    $region33: #{tpu_custom_call.1} parent=1 // pred_fallthru
      _
    %1933 = vsyncpa [#allocation4], 1
    %1934 = vsyncpa [#allocation6], 1

</llo_original>
